<compile_context>
chip_gen: v7x
topology: tpu7x:2x2x1
jax: 0.10.0
libtpu: 0.0.40
codegen_flags: <defaults>
</compile_context>

<pallas_src>
import math
from functools import partial

import jax
import jax.numpy as jnp
import numpy as np
from jax.experimental import pallas as pl
from jax.experimental.pallas import tpu as pltpu


# ----------------------------------------------------------------------------
# Pallas kernel: one (v5e/v6e) or two (v7x) fat grid steps; everything fused.
# ----------------------------------------------------------------------------
def primal_cos_kernel(x_ref, wqk_ref, bqk_ref, sel_ref, selT_ref, wewr_ref,
                      wc_ref, bc_ref, wo_ref, bo_ref, out_ref, *, mm_dtype):
    Bt, L, D = x_ref.shape
    HD2 = wqk_ref.shape[1]          # 2 * n_heads * d_keys   (q|k lanes)
    HR2 = wc_ref.shape[0]           # 2 * n_heads * low_rank (esc|rsc lanes)
    M = Bt * L

    x = x_ref[...].reshape(M, D)    # fuse batch rows -> big M dim

    # ---- fused Q|K projection: ONE wide MXU matmul --------------------------
    qk = jnp.dot(x.astype(mm_dtype), wqk_ref[...],
                 preferred_element_type=jnp.float32) + bqk_ref[...]   # (M,HD2) f32

    # ---- per-head L2 normalisation (== F.normalize, eps=1e-12) --------------
    # Factored block-column-ones selector, precomputed on the host (bf16):
    #   ss = ((qk*qk) @ S) @ S.T  with S of shape (HD2, 2H).
    # rsqrt(max(ss, eps^2)) == 1/max(||x||, eps); rsqrt runs on the EUP.
    ss_h = jnp.dot((qk * qk).astype(mm_dtype), sel_ref[...],
                   preferred_element_type=jnp.float32)                # (M, 2H)
    ss = jnp.dot(ss_h.astype(mm_dtype), selT_ref[...],
                 preferred_element_type=jnp.float32)                  # (M, HD2)
    qkn = qk * jax.lax.rsqrt(jnp.maximum(ss, 1e-24))                  # f32

    # ---- escore | rscore: batched block-diag(we|wr) matmul -------------------
    # NOTE: the weight is data-dependent per batch element, so with Bt > 1 this
    # lowers to Bt matmuls of M=L rows each.  Fine at small Bt/L; prefer Bt=1
    # per grid step when L is large (see wrapper comment).
    sc = jnp.einsum('bld,bde->ble',
                    qkn.reshape(Bt, L, HD2).astype(mm_dtype),
                    wewr_ref[...],
                    preferred_element_type=jnp.float32)               # (Bt,L,HR2)
    sc_flat = sc.reshape(M, HR2)

    # ---- concate_weight (block-diag over heads, no concatenation needed) ----
    o = jnp.dot(sc_flat.astype(mm_dtype), wc_ref[...],
                preferred_element_type=jnp.float32) + bc_ref[...]     # (M, HD)

    # ---- out_projection ------------------------------------------------------
    y = jnp.dot(o.astype(mm_dtype), wo_ref[...],
                preferred_element_type=jnp.float32) + bo_ref[...]     # (M, D)

    # ---- ONE lane-dense store: [ y | esc|rsc | qn|kn | zero-pad to 128*k ] ---
    W = out_ref.shape[-1]
    pad = W - (D + HR2 + HD2)       # static python int
    parts = [y, sc_flat, qkn]
    if pad:
        parts.append(jnp.zeros((M, pad), jnp.float32))
    out_ref[...] = jnp.concatenate(parts, axis=-1).reshape(Bt, L, W)


# ----------------------------------------------------------------------------
# Host-side helpers (layout plumbing; fused under jit with the kernel).
# ----------------------------------------------------------------------------
def _head_blockdiag(w):
    """(B, H, a, b) -> (B, H*a, H*b) block-diagonal over heads."""
    B, H, a, b = w.shape
    eye = jnp.eye(H, dtype=w.dtype)
    return (eye[None, :, None, :, None] * w[:, :, :, None, :]).reshape(B, H * a, H * b)


def _tile_blockdiag(w, H):
    """(a, b) -> (H*a, H*b) block-diagonal with the same block on every head."""
    a, b = w.shape
    eye = jnp.eye(H, dtype=w.dtype)
    return (eye[:, None, :, None] * w[None, :, None, :]).reshape(H * a, H * b)


def _pick_batch_block(B):
    """v5e/v6e (one TensorCore): one fat grid step.  v7x (two TensorCores):
    keep >= 2 parallel grid steps so the second core gets work."""
    kind = ""
    try:
        kind = jax.devices()[0].device_kind.lower()
    except Exception:
        pass
    if "v7" in kind and B % 2 == 0:
        return B // 2
    return B


# ----------------------------------------------------------------------------
# Wrapper: we/wr glue, weight fusion, pallas_call, layout restore.
# ----------------------------------------------------------------------------
def attention_layer_primal_cos(x, params, *, n_heads, low_rank, seq_len_sub,
                               batch_block=None, mm_dtype=jnp.bfloat16,
                               single_buffer_weights=True):
    B, L, d_model = x.shape
    H, R = n_heads, low_rank
    dk = d_model // H
    HD = H * dk
    HD2 = 2 * HD
    HR2 = 2 * H * R

    if batch_block is None:
        batch_block = _pick_batch_block(B)
    if B % batch_block != 0:
        batch_block = B
    Bt = batch_block
    # NOTE: for large L prefer Bt=1 per grid step (the score einsum then stays
    # one fat matmul); at small L/B a single fat step wins on per-step overhead.

    # --- glue: build we / wr exactly as the PyTorch forward does -------------
    # torch.linspace(...).long() truncates; np.linspace(...).astype(int32) does
    # the same (exact identity for the (L, len) used here).
    indices = np.linspace(0, L - 1, seq_len_sub).astype(np.int32)
    x_sub = x.transpose(0, 2, 1).reshape(B, H, dk, L)[:, :, :, indices]  # (B,H,dk,len)
    we = jnp.einsum('bhdl,hle->bhde', x_sub, params['We']).astype(jnp.float32)
    wr = jnp.einsum('bhdl,hle->bhde', x_sub, params['Wr']).astype(jnp.float32)

    # --- weight fusion / block-diagonal construction --------------------------
    wqk = jnp.concatenate([params['Wq'], params['Wk']], axis=1).astype(mm_dtype)  # (D,2HD)
    bqk = jnp.concatenate([params['bq'], params['bk']], axis=1)                   # (1,2HD) f32
    we_bd = _head_blockdiag(we)                              # (B, HD, H*R)
    wr_bd = _head_blockdiag(wr)                              # (B, HD, H*R)
    zeros = jnp.zeros_like(we_bd)
    # NOTE(scaling hazard): block-diag over heads carries H x extra zero bytes/
    # FLOPs; fine at H=4 (pads to 128 lanes anyway), revisit for H >= 8.
    wewr_bd = jnp.concatenate(
        [jnp.concatenate([we_bd, zeros], axis=2),
         jnp.concatenate([zeros, wr_bd], axis=2)], axis=1).astype(mm_dtype)  # (B,2HD,2HR)
    wc = params['Wc']
    wc_full = jnp.concatenate([_tile_blockdiag(wc[:R], H),
                               _tile_blockdiag(wc[R:], H)], axis=0).astype(mm_dtype)
    bc_t = jnp.tile(params['bc'], (1, H))                    # (1, HD) f32
    wo = params['Wo'].astype(mm_dtype)
    bo = params['bo']

    # Factored per-head sum-of-squares selector, hoisted out of the kernel.
    sel_np = np.zeros((HD2, 2 * H), np.float32)
    sel_np[np.arange(HD2), np.arange(HD2) // dk] = 1.0
    sel = jnp.asarray(sel_np, dtype=mm_dtype)                # (2HD, 2H)
    selT = jnp.asarray(sel_np.T, dtype=mm_dtype)             # (2H, 2HD)

    # Combined lane-dense output slab [ y | esc|rsc | qn|kn ], padded to 128*k.
    w_data = d_model + HR2 + HD2
    w_pad = ((w_data + 127) // 128) * 128

    # Constant-index weights never change across the grid -> single-buffer them.
    const_kw = {"pipeline_mode": pl.Buffered(1)} if single_buffer_weights else {}

    def const_spec(shape):
        return pl.BlockSpec(shape, lambda b: (0,) * len(shape), **const_kw)

    grid_spec = pltpu.PrefetchScalarGridSpec(
        num_scalar_prefetch=0,
        grid=(B // Bt,),
        in_specs=[
            pl.BlockSpec((Bt, L, d_model), lambda b: (b, 0, 0)),   # x
            const_spec((d_model, HD2)),                            # Wq|Wk fused
            const_spec((1, HD2)),                                  # bq|bk fused
            const_spec((HD2, 2 * H)),                              # selector S
            const_spec((2 * H, HD2)),                              # selector S.T
            pl.BlockSpec((Bt, HD2, HR2), lambda b: (b, 0, 0)),     # blockdiag we|wr
            const_spec((HR2, HD)),                                 # blockdiag Wc
            const_spec((1, HD)),                                   # tiled bc
            const_spec((HD, d_model)),                             # Wo
            const_spec((1, d_model)),                              # bo
        ],
        out_specs=pl.BlockSpec((Bt, L, w_pad), lambda b: (b, 0, 0)),
    )

    # Explicit VMEM budget (v7x: 64 MiB physical / 32 MiB default scoped).
    mm_sz = np.dtype(mm_dtype).itemsize
    blk_bytes = (2 * Bt * L * d_model * 4          # x block, double-buffered
                 + 2 * Bt * HD2 * HR2 * mm_sz      # wewr block, double-buffered
                 + 2 * Bt * L * w_pad * 4)         # output slab
    const_bytes = ((d_model * HD2 + HR2 * HD + HD * d_model + HD2 * 2 * H * 2) * mm_sz
                   + (HD2 + HD + d_model) * 4)
    const_bytes *= 1 if single_buffer_weights else 2
    vmem_limit = int(min(max(4 * (blk_bytes + const_bytes), 16 << 20), 48 << 20))

    out = pl.pallas_call(
        partial(primal_cos_kernel, mm_dtype=mm_dtype),
        out_shape=jax.ShapeDtypeStruct((B, L, w_pad), jnp.float32),
        grid_spec=grid_spec,
        compiler_params=pltpu.CompilerParams(
            dimension_semantics=("parallel",),
            vmem_limit_bytes=vmem_limit),
    )(x, wqk, bqk, sel, selT, wewr_bd, wc_full, bc_t, wo, bo)

    # --- wrapper-side layout plumbing back to the PyTorch return layout ------
    y = out[:, :, :d_model]
    sc = out[:, :, d_model:d_model + HR2]
    qkn = out[:, :, d_model + HR2:d_model + HR2 + HD2]
    escore = sc[:, :, :H * R].reshape(B, L, H, R).transpose(0, 2, 1, 3)
    rscore = sc[:, :, H * R:].reshape(B, L, H, R).transpose(0, 2, 1, 3)
    q_norm = qkn[:, :, :HD].reshape(B, L, H, dk).transpose(0, 2, 1, 3)
    k_norm = qkn[:, :, HD:].reshape(B, L, H, dk).transpose(0, 2, 1, 3)

    # Same return structure as the PyTorch module:
    # (out_projection(out), [escore, rscore, We, Wr, queries, keys], Lambda)
    scores = [escore, rscore, params['We'], params['Wr'], q_norm, k_norm]
    return y, scores, params['Lambda']


# ----------------------------------------------------------------------------
# Pure-JAX f32 reference (mirrors the PyTorch forward) for correctness check.
# ----------------------------------------------------------------------------
def reference(x, params, *, n_heads, low_rank, seq_len_sub):
    B, L, d_model = x.shape
    H = n_heads
    dk = d_model // H

    q = x @ params['Wq'] + params['bq'][0]
    k = x @ params['Wk'] + params['bk'][0]
    q = q.reshape(B, L, H, dk).transpose(0, 2, 1, 3)
    k = k.reshape(B, L, H, dk).transpose(0, 2, 1, 3)
    qn = q / jnp.maximum(jnp.linalg.norm(q, axis=-1, keepdims=True), 1e-12)
    kn = k / jnp.maximum(jnp.linalg.norm(k, axis=-1, keepdims=True), 1e-12)

    indices = np.linspace(0, L - 1, seq_len_sub).astype(np.int32)
    x_sub = x.transpose(0, 2, 1).reshape(B, H, dk, L)[:, :, :, indices]
    we = jnp.einsum('bhdl,hle->bhde', x_sub, params['We'])
    wr = jnp.einsum('bhdl,hle->bhde', x_sub, params['Wr'])

    esc = jnp.einsum('bhnd,bhde->bhne', qn, we)
    rsc = jnp.einsum('bhnd,bhde->bhne', kn, wr)
    score = jnp.concatenate([esc, rsc], axis=-1)
    oh = score @ params['Wc'] + params['bc'][0]              # (B,H,L,dk)
    o = oh.transpose(0, 2, 1, 3).reshape(B, L, H * dk)
    y = o @ params['Wo'] + params['bo'][0]
    return y, esc, rsc, qn, kn


# ----------------------------------------------------------------------------
if __name__ == "__main__":
    # Small shapes consistent with the module.
    B, L, d_model, n_heads = 4, 16, 32, 4
    low_rank, rank_multi, max_seq_len = 5, 10, 16
    d_keys = d_model // n_heads
    HD = d_keys * n_heads
    seq_len_sub = min(max_seq_len, low_rank * rank_multi)     # = 16

    key = jax.random.PRNGKey(0)
    ks = jax.random.split(key, 12)

    def lin_w(k, fan_in, shape):
        bound = 1.0 / math.sqrt(fan_in)
        return jax.random.uniform(k, shape, jnp.float32, -bound, bound)

    ortho = jax.nn.initializers.orthogonal()
    params = {
        # Linear weights stored as (in, out), biases as (1, out).
        'Wq': lin_w(ks[0], d_model, (d_model, HD)),
        'bq': lin_w(ks[1], d_model, (1, HD)),
        'Wk': lin_w(ks[2], d_model, (d_model, HD)),
        'bk': lin_w(ks[3], d_model, (1, HD)),
        'Wc': lin_w(ks[4], 2 * low_rank, (2 * low_rank, d_keys)),
        'bc': lin_w(ks[5], 2 * low_rank, (1, d_keys)),
        'Wo': lin_w(ks[6], HD, (HD, d_model)),
        'bo': lin_w(ks[7], HD, (1, d_model)),
        'We': ortho(ks[8], (n_heads, seq_len_sub, low_rank), jnp.float32),
        'Wr': ortho(ks[9], (n_heads, seq_len_sub, low_rank), jnp.float32),
        'Lambda': jax.random.uniform(ks[10], (n_heads, low_rank), jnp.float32),
    }
    # TODO(synk): the module's nn.Dropout layers are never applied on the
    # primal_cos forward path, so they are intentionally omitted.

    x = jax.random.normal(ks[11], (B, L, d_model), jnp.float32)

    y_ref, esc_ref, rsc_ref, qn_ref, kn_ref = reference(
        x, params, n_heads=n_heads, low_rank=low_rank, seq_len_sub=seq_len_sub)

    def run_and_check(single_buffer_weights):
        # Glue einsum + weight fusion + pallas_call all live in one jit.
        fwd = jax.jit(partial(attention_layer_primal_cos,
                              n_heads=n_heads, low_rank=low_rank,
                              seq_len_sub=seq_len_sub, batch_block=None,
                              mm_dtype=jnp.bfloat16,
                              single_buffer_weights=single_buffer_weights))
        y, scores, Lambda = fwd(x, params)
        jax.block_until_ready((y, scores, Lambda))

        # Correctness check against a pure-f32 reference.  Tolerances account
        # for bf16 MXU operands (f32 accumulation everywhere).
        np.testing.assert_allclose(np.asarray(y), np.asarray(y_ref),
                                   rtol=5e-2, atol=5e-2)
        np.testing.assert_allclose(np.asarray(scores[0]), np.asarray(esc_ref),
                                   rtol=3e-2, atol=3e-2)
        np.testing.assert_allclose(np.asarray(scores[1]), np.asarray(rsc_ref),
                                   rtol=3e-2, atol=3e-2)
        np.testing.assert_allclose(np.asarray(scores[4]), np.asarray(qn_ref),
                                   rtol=3e-2, atol=3e-2)
        np.testing.assert_allclose(np.asarray(scores[5]), np.asarray(kn_ref),
                                   rtol=3e-2, atol=3e-2)

    try:
        run_and_check(single_buffer_weights=True)
    except Exception:
        # Fallback if the installed Pallas rejects pipeline_mode=pl.Buffered(1)
        # for the constant weight operands: default double-buffering.
        run_and_check(single_buffer_weights=False)

    print("KERNEL_OK")
</pallas_src>

<mosaic_0001>
module attributes {stable_mosaic.version = 11 : i64} {
  func.func @primal_cos_kernel(%arg0: i32, %arg1: memref<4x16x32xf32, #tpu.memory_space<vmem>>, %arg2: memref<32x64xbf16, #tpu.memory_space<vmem>>, %arg3: memref<1x64xf32, #tpu.memory_space<vmem>>, %arg4: memref<64x8xbf16, #tpu.memory_space<vmem>>, %arg5: memref<8x64xbf16, #tpu.memory_space<vmem>>, %arg6: memref<4x64x40xbf16, #tpu.memory_space<vmem>>, %arg7: memref<40x32xbf16, #tpu.memory_space<vmem>>, %arg8: memref<1x32xf32, #tpu.memory_space<vmem>>, %arg9: memref<32x32xbf16, #tpu.memory_space<vmem>>, %arg10: memref<1x32xf32, #tpu.memory_space<vmem>>, %arg11: memref<4x16x256xf32, #tpu.memory_space<vmem>>) attributes {dimension_semantics = [#tpu.dimension_semantics<parallel>], iteration_bounds = array<i64: 1>, scalar_prefetch = 0 : i64, scratch_operands = 0 : i64, tpu.core_type = #tpu.core_type<tc>, window_params = [{transform_indices = @transform_0, window_bounds = array<i64: 4, 16, 32>}, {pipeline_mode = #tpu.pipeline_mode<synchronous>, transform_indices = @transform_1, window_bounds = array<i64: 32, 64>}, {pipeline_mode = #tpu.pipeline_mode<synchronous>, transform_indices = @transform_2, window_bounds = array<i64: 1, 64>}, {pipeline_mode = #tpu.pipeline_mode<synchronous>, transform_indices = @transform_3, window_bounds = array<i64: 64, 8>}, {pipeline_mode = #tpu.pipeline_mode<synchronous>, transform_indices = @transform_4, window_bounds = array<i64: 8, 64>}, {transform_indices = @transform_5, window_bounds = array<i64: 4, 64, 40>}, {pipeline_mode = #tpu.pipeline_mode<synchronous>, transform_indices = @transform_6, window_bounds = array<i64: 40, 32>}, {pipeline_mode = #tpu.pipeline_mode<synchronous>, transform_indices = @transform_7, window_bounds = array<i64: 1, 32>}, {pipeline_mode = #tpu.pipeline_mode<synchronous>, transform_indices = @transform_8, window_bounds = array<i64: 32, 32>}, {pipeline_mode = #tpu.pipeline_mode<synchronous>, transform_indices = @transform_9, window_bounds = array<i64: 1, 32>}, {transform_indices = @transform_10, window_bounds = array<i64: 4, 16, 256>}]} {
    %c0 = arith.constant 0 : index
    %c0_0 = arith.constant 0 : index
    %c0_1 = arith.constant 0 : index
    %0 = vector.load %arg1[%c0, %c0_0, %c0_1] : memref<4x16x32xf32, #tpu.memory_space<vmem>>, vector<4x16x32xf32>
    %1 = vector.shape_cast %0 : vector<4x16x32xf32> to vector<64x32xf32>
    %2 = arith.truncf %1 : vector<64x32xf32> to vector<64x32xbf16>
    %c0_2 = arith.constant 0 : index
    %c0_3 = arith.constant 0 : index
    %3 = vector.load %arg2[%c0_2, %c0_3] : memref<32x64xbf16, #tpu.memory_space<vmem>>, vector<32x64xbf16>
    %cst = arith.constant dense<0.000000e+00> : vector<64x64xf32>
    %4 = tpu.matmul %2, %3, %cst {dimension_numbers = #tpu.dot_dimension_numbers<[1], [0], [0], [1], [0, 0, 1, 1], [], []>} : vector<64x32xbf16>, vector<32x64xbf16>, vector<64x64xf32> -> vector<64x64xf32>
    %c0_4 = arith.constant 0 : index
    %c0_5 = arith.constant 0 : index
    %5 = vector.load %arg3[%c0_4, %c0_5] : memref<1x64xf32, #tpu.memory_space<vmem>>, vector<1x64xf32>
    %6 = vector.broadcast %5 : vector<1x64xf32> to vector<64x64xf32>
    %7 = arith.addf %4, %6 : vector<64x64xf32>
    %8 = arith.mulf %7, %7 : vector<64x64xf32>
    %9 = arith.truncf %8 : vector<64x64xf32> to vector<64x64xbf16>
    %c0_6 = arith.constant 0 : index
    %c0_7 = arith.constant 0 : index
    %10 = vector.load %arg4[%c0_6, %c0_7] : memref<64x8xbf16, #tpu.memory_space<vmem>>, vector<64x8xbf16>
    %cst_8 = arith.constant dense<0.000000e+00> : vector<64x8xf32>
    %11 = tpu.matmul %9, %10, %cst_8 {dimension_numbers = #tpu.dot_dimension_numbers<[1], [0], [0], [1], [0, 0, 1, 1], [], []>} : vector<64x64xbf16>, vector<64x8xbf16>, vector<64x8xf32> -> vector<64x8xf32>
    %12 = arith.truncf %11 : vector<64x8xf32> to vector<64x8xbf16>
    %c0_9 = arith.constant 0 : index
    %c0_10 = arith.constant 0 : index
    %13 = vector.load %arg5[%c0_9, %c0_10] : memref<8x64xbf16, #tpu.memory_space<vmem>>, vector<8x64xbf16>
    %cst_11 = arith.constant dense<0.000000e+00> : vector<64x64xf32>
    %14 = tpu.matmul %12, %13, %cst_11 {dimension_numbers = #tpu.dot_dimension_numbers<[1], [0], [0], [1], [0, 0, 1, 1], [], []>} : vector<64x8xbf16>, vector<8x64xbf16>, vector<64x64xf32> -> vector<64x64xf32>
    %cst_12 = arith.constant 1.000000e-24 : f32
    %15 = vector.broadcast %cst_12 : f32 to vector<64x64xf32>
    %16 = arith.maximumf %14, %15 : vector<64x64xf32>
    %17 = math.rsqrt %16 : vector<64x64xf32>
    %18 = arith.mulf %7, %17 : vector<64x64xf32>
    %19 = vector.shape_cast %18 : vector<64x64xf32> to vector<4x16x64xf32>
    %20 = arith.truncf %19 : vector<4x16x64xf32> to vector<4x16x64xbf16>
    %c0_13 = arith.constant 0 : index
    %c0_14 = arith.constant 0 : index
    %c0_15 = arith.constant 0 : index
    %21 = vector.load %arg6[%c0_13, %c0_14, %c0_15] : memref<4x64x40xbf16, #tpu.memory_space<vmem>>, vector<4x64x40xbf16>
    "tpu.trace_start"() <{level = 10 : i32, message = "bld,bde->ble"}> : () -> ()
    %cst_16 = arith.constant dense<0.000000e+00> : vector<4x16x40xf32>
    %22 = tpu.matmul %20, %21, %cst_16 {dimension_numbers = #tpu.dot_dimension_numbers<[2], [1], [1], [2], [0, 0, 0, 1, 1, 2], [0], [0]>} : vector<4x16x64xbf16>, vector<4x64x40xbf16>, vector<4x16x40xf32> -> vector<4x16x40xf32>
    "tpu.trace_stop"() : () -> ()
    %23 = vector.shape_cast %22 : vector<4x16x40xf32> to vector<64x40xf32>
    %24 = arith.truncf %23 : vector<64x40xf32> to vector<64x40xbf16>
    %c0_17 = arith.constant 0 : index
    %c0_18 = arith.constant 0 : index
    %25 = vector.load %arg7[%c0_17, %c0_18] : memref<40x32xbf16, #tpu.memory_space<vmem>>, vector<40x32xbf16>
    %cst_19 = arith.constant dense<0.000000e+00> : vector<64x32xf32>
    %26 = tpu.matmul %24, %25, %cst_19 {dimension_numbers = #tpu.dot_dimension_numbers<[1], [0], [0], [1], [0, 0, 1, 1], [], []>} : vector<64x40xbf16>, vector<40x32xbf16>, vector<64x32xf32> -> vector<64x32xf32>
    %c0_20 = arith.constant 0 : index
    %c0_21 = arith.constant 0 : index
    %27 = vector.load %arg8[%c0_20, %c0_21] : memref<1x32xf32, #tpu.memory_space<vmem>>, vector<1x32xf32>
    %28 = vector.broadcast %27 : vector<1x32xf32> to vector<64x32xf32>
    %29 = arith.addf %26, %28 : vector<64x32xf32>
    %30 = arith.truncf %29 : vector<64x32xf32> to vector<64x32xbf16>
    %c0_22 = arith.constant 0 : index
    %c0_23 = arith.constant 0 : index
    %31 = vector.load %arg9[%c0_22, %c0_23] : memref<32x32xbf16, #tpu.memory_space<vmem>>, vector<32x32xbf16>
    %cst_24 = arith.constant dense<0.000000e+00> : vector<64x32xf32>
    %32 = tpu.matmul %30, %31, %cst_24 {dimension_numbers = #tpu.dot_dimension_numbers<[1], [0], [0], [1], [0, 0, 1, 1], [], []>} : vector<64x32xbf16>, vector<32x32xbf16>, vector<64x32xf32> -> vector<64x32xf32>
    %c0_25 = arith.constant 0 : index
    %c0_26 = arith.constant 0 : index
    %33 = vector.load %arg10[%c0_25, %c0_26] : memref<1x32xf32, #tpu.memory_space<vmem>>, vector<1x32xf32>
    %34 = vector.broadcast %33 : vector<1x32xf32> to vector<64x32xf32>
    %35 = arith.addf %32, %34 : vector<64x32xf32>
    %cst_27 = arith.constant 0.000000e+00 : f32
    %36 = vector.broadcast %cst_27 : f32 to vector<64x120xf32>
    %37 = tpu.concatenate %35, %23, %18, %36 in 1 : vector<64x32xf32>, vector<64x40xf32>, vector<64x64xf32>, vector<64x120xf32> -> vector<64x256xf32>
    %38 = vector.shape_cast %37 : vector<64x256xf32> to vector<4x16x256xf32>
    %c0_28 = arith.constant 0 : index
    %c0_29 = arith.constant 0 : index
    %c0_30 = arith.constant 0 : index
    %39 = vector.load %arg11[%c0_28, %c0_29, %c0_30] : memref<4x16x256xf32, #tpu.memory_space<vmem>>, vector<4x16x256xf32>
    tpu.vector_store %arg11[%c0_28, %c0_29, %c0_30], %38 {strides = array<i32>} : memref<4x16x256xf32, #tpu.memory_space<vmem>>, vector<4x16x256xf32>,
    return
  }
  func.func @transform_0(%arg0: i32) -> (i32, i32, i32) {
    %c0_i32 = arith.constant 0 : i32
    %c0_i32_0 = arith.constant 0 : i32
    %c0_i32_1 = arith.constant 0 : i32
    return %arg0, %c0_i32, %c0_i32_0 : i32, i32, i32
  }
  func.func @transform_1(%arg0: i32) -> (i32, i32) {
    %c0_i32 = arith.constant 0 : i32
    %c0_i32_0 = arith.constant 0 : i32
    %c0_i32_1 = arith.constant 0 : i32
    return %c0_i32, %c0_i32_0 : i32, i32
  }
  func.func @transform_2(%arg0: i32) -> (i32, i32) {
    %c0_i32 = arith.constant 0 : i32
    %c0_i32_0 = arith.constant 0 : i32
    %c0_i32_1 = arith.constant 0 : i32
    return %c0_i32, %c0_i32_0 : i32, i32
  }
  func.func @transform_3(%arg0: i32) -> (i32, i32) {
    %c0_i32 = arith.constant 0 : i32
    %c0_i32_0 = arith.constant 0 : i32
    %c0_i32_1 = arith.constant 0 : i32
    return %c0_i32, %c0_i32_0 : i32, i32
  }
  func.func @transform_4(%arg0: i32) -> (i32, i32) {
    %c0_i32 = arith.constant 0 : i32
    %c0_i32_0 = arith.constant 0 : i32
    %c0_i32_1 = arith.constant 0 : i32
    return %c0_i32, %c0_i32_0 : i32, i32
  }
  func.func @transform_5(%arg0: i32) -> (i32, i32, i32) {
    %c0_i32 = arith.constant 0 : i32
    %c0_i32_0 = arith.constant 0 : i32
    %c0_i32_1 = arith.constant 0 : i32
    return %arg0, %c0_i32, %c0_i32_0 : i32, i32, i32
  }
  func.func @transform_6(%arg0: i32) -> (i32, i32) {
    %c0_i32 = arith.constant 0 : i32
    %c0_i32_0 = arith.constant 0 : i32
    %c0_i32_1 = arith.constant 0 : i32
    return %c0_i32, %c0_i32_0 : i32, i32
  }
  func.func @transform_7(%arg0: i32) -> (i32, i32) {
    %c0_i32 = arith.constant 0 : i32
    %c0_i32_0 = arith.constant 0 : i32
    %c0_i32_1 = arith.constant 0 : i32
    return %c0_i32, %c0_i32_0 : i32, i32
  }
  func.func @transform_8(%arg0: i32) -> (i32, i32) {
    %c0_i32 = arith.constant 0 : i32
    %c0_i32_0 = arith.constant 0 : i32
    %c0_i32_1 = arith.constant 0 : i32
    return %c0_i32, %c0_i32_0 : i32, i32
  }
  func.func @transform_9(%arg0: i32) -> (i32, i32) {
    %c0_i32 = arith.constant 0 : i32
    %c0_i32_0 = arith.constant 0 : i32
    %c0_i32_1 = arith.constant 0 : i32
    return %c0_i32, %c0_i32_0 : i32, i32
  }
  func.func @transform_10(%arg0: i32) -> (i32, i32, i32) {
    %c0_i32 = arith.constant 0 : i32
    %c0_i32_0 = arith.constant 0 : i32
    %c0_i32_1 = arith.constant 0 : i32
    return %arg0, %c0_i32, %c0_i32_0 : i32, i32, i32
  }
}

module attributes {stable_mosaic.version = 11 : i64} {
  func.func @primal_cos_kernel(%arg0: i32, %arg1: memref<4x16x32xf32, #tpu.memory_space<vmem>>, %arg2: memref<32x64xbf16, #tpu.memory_space<vmem>>, %arg3: memref<1x64xf32, #tpu.memory_space<vmem>>, %arg4: memref<64x8xbf16, #tpu.memory_space<vmem>>, %arg5: memref<8x64xbf16, #tpu.memory_space<vmem>>, %arg6: memref<4x64x40xbf16, #tpu.memory_space<vmem>>, %arg7: memref<40x32xbf16, #tpu.memory_space<vmem>>, %arg8: memref<1x32xf32, #tpu.memory_space<vmem>>, %arg9: memref<32x32xbf16, #tpu.memory_space<vmem>>, %arg10: memref<1x32xf32, #tpu.memory_space<vmem>>, %arg11: memref<4x16x256xf32, #tpu.memory_space<vmem>>) attributes {dimension_semantics = [#tpu.dimension_semantics<parallel>], iteration_bounds = array<i64: 1>, scalar_prefetch = 0 : i64, scratch_operands = 0 : i64, tpu.core_type = #tpu.core_type<tc>, window_params = [{transform_indices = @transform_0, window_bounds = array<i64: 4, 16, 32>}, {pipeline_mode = #tpu.pipeline_mode<synchronous>, transform_indices = @transform_1, window_bounds = array<i64: 32, 64>}, {pipeline_mode = #tpu.pipeline_mode<synchronous>, transform_indices = @transform_2, window_bounds = array<i64: 1, 64>}, {pipeline_mode = #tpu.pipeline_mode<synchronous>, transform_indices = @transform_3, window_bounds = array<i64: 64, 8>}, {pipeline_mode = #tpu.pipeline_mode<synchronous>, transform_indices = @transform_4, window_bounds = array<i64: 8, 64>}, {transform_indices = @transform_5, window_bounds = array<i64: 4, 64, 40>}, {pipeline_mode = #tpu.pipeline_mode<synchronous>, transform_indices = @transform_6, window_bounds = array<i64: 40, 32>}, {pipeline_mode = #tpu.pipeline_mode<synchronous>, transform_indices = @transform_7, window_bounds = array<i64: 1, 32>}, {pipeline_mode = #tpu.pipeline_mode<synchronous>, transform_indices = @transform_8, window_bounds = array<i64: 32, 32>}, {pipeline_mode = #tpu.pipeline_mode<synchronous>, transform_indices = @transform_9, window_bounds = array<i64: 1, 32>}, {transform_indices = @transform_10, window_bounds = array<i64: 4, 16, 256>}]} {
    %c0 = arith.constant 0 : index
    %c0_0 = arith.constant 0 : index
    %c0_1 = arith.constant 0 : index
    %0 = vector.load %arg1[%c0, %c0_0, %c0_1] : memref<4x16x32xf32, #tpu.memory_space<vmem>>, vector<4x16x32xf32>
    %1 = vector.shape_cast %0 : vector<4x16x32xf32> to vector<64x32xf32>
    %2 = arith.truncf %1 : vector<64x32xf32> to vector<64x32xbf16>
    %c0_2 = arith.constant 0 : index
    %c0_3 = arith.constant 0 : index
    %3 = vector.load %arg2[%c0_2, %c0_3] : memref<32x64xbf16, #tpu.memory_space<vmem>>, vector<32x64xbf16>
    %cst = arith.constant dense<0.000000e+00> : vector<64x64xf32>
    %4 = tpu.matmul %2, %3, %cst {dimension_numbers = #tpu.dot_dimension_numbers<[1], [0], [0], [1], [0, 0, 1, 1], [], []>} : vector<64x32xbf16>, vector<32x64xbf16>, vector<64x64xf32> -> vector<64x64xf32>
    %c0_4 = arith.constant 0 : index
    %c0_5 = arith.constant 0 : index
    %5 = vector.load %arg3[%c0_4, %c0_5] : memref<1x64xf32, #tpu.memory_space<vmem>>, vector<1x64xf32>
    %6 = vector.broadcast %5 : vector<1x64xf32> to vector<64x64xf32>
    %7 = arith.addf %4, %6 : vector<64x64xf32>
    %8 = arith.mulf %7, %7 : vector<64x64xf32>
    %9 = arith.truncf %8 : vector<64x64xf32> to vector<64x64xbf16>
    %c0_6 = arith.constant 0 : index
    %c0_7 = arith.constant 0 : index
    %10 = vector.load %arg4[%c0_6, %c0_7] : memref<64x8xbf16, #tpu.memory_space<vmem>>, vector<64x8xbf16>
    %cst_8 = arith.constant dense<0.000000e+00> : vector<64x8xf32>
    %11 = tpu.matmul %9, %10, %cst_8 {dimension_numbers = #tpu.dot_dimension_numbers<[1], [0], [0], [1], [0, 0, 1, 1], [], []>} : vector<64x64xbf16>, vector<64x8xbf16>, vector<64x8xf32> -> vector<64x8xf32>
    %12 = arith.truncf %11 : vector<64x8xf32> to vector<64x8xbf16>
    %c0_9 = arith.constant 0 : index
    %c0_10 = arith.constant 0 : index
    %13 = vector.load %arg5[%c0_9, %c0_10] : memref<8x64xbf16, #tpu.memory_space<vmem>>, vector<8x64xbf16>
    %cst_11 = arith.constant dense<0.000000e+00> : vector<64x64xf32>
    %14 = tpu.matmul %12, %13, %cst_11 {dimension_numbers = #tpu.dot_dimension_numbers<[1], [0], [0], [1], [0, 0, 1, 1], [], []>} : vector<64x8xbf16>, vector<8x64xbf16>, vector<64x64xf32> -> vector<64x64xf32>
    %cst_12 = arith.constant 1.000000e-24 : f32
    %15 = vector.broadcast %cst_12 : f32 to vector<64x64xf32>
    %16 = arith.maximumf %14, %15 : vector<64x64xf32>
    %17 = math.rsqrt %16 : vector<64x64xf32>
    %18 = arith.mulf %7, %17 : vector<64x64xf32>
    %19 = vector.shape_cast %18 : vector<64x64xf32> to vector<4x16x64xf32>
    %20 = arith.truncf %19 : vector<4x16x64xf32> to vector<4x16x64xbf16>
    %c0_13 = arith.constant 0 : index
    %c0_14 = arith.constant 0 : index
    %c0_15 = arith.constant 0 : index
    %21 = vector.load %arg6[%c0_13, %c0_14, %c0_15] : memref<4x64x40xbf16, #tpu.memory_space<vmem>>, vector<4x64x40xbf16>
    "tpu.trace_start"() <{level = 10 : i32, message = "bld,bde->ble"}> : () -> ()
    %cst_16 = arith.constant dense<0.000000e+00> : vector<4x16x40xf32>
    %22 = tpu.matmul %20, %21, %cst_16 {dimension_numbers = #tpu.dot_dimension_numbers<[2], [1], [1], [2], [0, 0, 0, 1, 1, 2], [0], [0]>} : vector<4x16x64xbf16>, vector<4x64x40xbf16>, vector<4x16x40xf32> -> vector<4x16x40xf32>
    "tpu.trace_stop"() : () -> ()
    %23 = vector.shape_cast %22 : vector<4x16x40xf32> to vector<64x40xf32>
    %24 = arith.truncf %23 : vector<64x40xf32> to vector<64x40xbf16>
    %c0_17 = arith.constant 0 : index
    %c0_18 = arith.constant 0 : index
    %25 = vector.load %arg7[%c0_17, %c0_18] : memref<40x32xbf16, #tpu.memory_space<vmem>>, vector<40x32xbf16>
    %cst_19 = arith.constant dense<0.000000e+00> : vector<64x32xf32>
    %26 = tpu.matmul %24, %25, %cst_19 {dimension_numbers = #tpu.dot_dimension_numbers<[1], [0], [0], [1], [0, 0, 1, 1], [], []>} : vector<64x40xbf16>, vector<40x32xbf16>, vector<64x32xf32> -> vector<64x32xf32>
    %c0_20 = arith.constant 0 : index
    %c0_21 = arith.constant 0 : index
    %27 = vector.load %arg8[%c0_20, %c0_21] : memref<1x32xf32, #tpu.memory_space<vmem>>, vector<1x32xf32>
    %28 = vector.broadcast %27 : vector<1x32xf32> to vector<64x32xf32>
    %29 = arith.addf %26, %28 : vector<64x32xf32>
    %30 = arith.truncf %29 : vector<64x32xf32> to vector<64x32xbf16>
    %c0_22 = arith.constant 0 : index
    %c0_23 = arith.constant 0 : index
    %31 = vector.load %arg9[%c0_22, %c0_23] : memref<32x32xbf16, #tpu.memory_space<vmem>>, vector<32x32xbf16>
    %cst_24 = arith.constant dense<0.000000e+00> : vector<64x32xf32>
    %32 = tpu.matmul %30, %31, %cst_24 {dimension_numbers = #tpu.dot_dimension_numbers<[1], [0], [0], [1], [0, 0, 1, 1], [], []>} : vector<64x32xbf16>, vector<32x32xbf16>, vector<64x32xf32> -> vector<64x32xf32>
    %c0_25 = arith.constant 0 : index
    %c0_26 = arith.constant 0 : index
    %33 = vector.load %arg10[%c0_25, %c0_26] : memref<1x32xf32, #tpu.memory_space<vmem>>, vector<1x32xf32>
    %34 = vector.broadcast %33 : vector<1x32xf32> to vector<64x32xf32>
    %35 = arith.addf %32, %34 : vector<64x32xf32>
    %cst_27 = arith.constant 0.000000e+00 : f32
    %36 = vector.broadcast %cst_27 : f32 to vector<64x120xf32>
    %37 = tpu.concatenate %35, %23, %18, %36 in 1 : vector<64x32xf32>, vector<64x40xf32>, vector<64x64xf32>, vector<64x120xf32> -> vector<64x256xf32>
    %38 = vector.shape_cast %37 : vector<64x256xf32> to vector<4x16x256xf32>
    %c0_28 = arith.constant 0 : index
    %c0_29 = arith.constant 0 : index
    %c0_30 = arith.constant 0 : index
    %39 = vector.load %arg11[%c0_28, %c0_29, %c0_30] : memref<4x16x256xf32, #tpu.memory_space<vmem>>, vector<4x16x256xf32>
    tpu.vector_store %arg11[%c0_28, %c0_29, %c0_30], %38 {strides = array<i32>} : memref<4x16x256xf32, #tpu.memory_space<vmem>>, vector<4x16x256xf32>,
    return
  }
  func.func @transform_0(%arg0: i32) -> (i32, i32, i32) {
    %c0_i32 = arith.constant 0 : i32
    %c0_i32_0 = arith.constant 0 : i32
    %c0_i32_1 = arith.constant 0 : i32
    return %arg0, %c0_i32, %c0_i32_0 : i32, i32, i32
  }
  func.func @transform_1(%arg0: i32) -> (i32, i32) {
    %c0_i32 = arith.constant 0 : i32
    %c0_i32_0 = arith.constant 0 : i32
    %c0_i32_1 = arith.constant 0 : i32
    return %c0_i32, %c0_i32_0 : i32, i32
  }
  func.func @transform_2(%arg0: i32) -> (i32, i32) {
    %c0_i32 = arith.constant 0 : i32
    %c0_i32_0 = arith.constant 0 : i32
    %c0_i32_1 = arith.constant 0 : i32
    return %c0_i32, %c0_i32_0 : i32, i32
  }
  func.func @transform_3(%arg0: i32) -> (i32, i32) {
    %c0_i32 = arith.constant 0 : i32
    %c0_i32_0 = arith.constant 0 : i32
    %c0_i32_1 = arith.constant 0 : i32
    return %c0_i32, %c0_i32_0 : i32, i32
  }
  func.func @transform_4(%arg0: i32) -> (i32, i32) {
    %c0_i32 = arith.constant 0 : i32
    %c0_i32_0 = arith.constant 0 : i32
    %c0_i32_1 = arith.constant 0 : i32
    return %c0_i32, %c0_i32_0 : i32, i32
  }
  func.func @transform_5(%arg0: i32) -> (i32, i32, i32) {
    %c0_i32 = arith.constant 0 : i32
    %c0_i32_0 = arith.constant 0 : i32
    %c0_i32_1 = arith.constant 0 : i32
    return %arg0, %c0_i32, %c0_i32_0 : i32, i32, i32
  }
  func.func @transform_6(%arg0: i32) -> (i32, i32) {
    %c0_i32 = arith.constant 0 : i32
    %c0_i32_0 = arith.constant 0 : i32
    %c0_i32_1 = arith.constant 0 : i32
    return %c0_i32, %c0_i32_0 : i32, i32
  }
  func.func @transform_7(%arg0: i32) -> (i32, i32) {
    %c0_i32 = arith.constant 0 : i32
    %c0_i32_0 = arith.constant 0 : i32
    %c0_i32_1 = arith.constant 0 : i32
    return %c0_i32, %c0_i32_0 : i32, i32
  }
  func.func @transform_8(%arg0: i32) -> (i32, i32) {
    %c0_i32 = arith.constant 0 : i32
    %c0_i32_0 = arith.constant 0 : i32
    %c0_i32_1 = arith.constant 0 : i32
    return %c0_i32, %c0_i32_0 : i32, i32
  }
  func.func @transform_9(%arg0: i32) -> (i32, i32) {
    %c0_i32 = arith.constant 0 : i32
    %c0_i32_0 = arith.constant 0 : i32
    %c0_i32_1 = arith.constant 0 : i32
    return %c0_i32, %c0_i32_0 : i32, i32
  }
  func.func @transform_10(%arg0: i32) -> (i32, i32, i32) {
    %c0_i32 = arith.constant 0 : i32
    %c0_i32_0 = arith.constant 0 : i32
    %c0_i32_1 = arith.constant 0 : i32
    return %arg0, %c0_i32, %c0_i32_0 : i32, i32, i32
  }
}

</mosaic_0001>

<llo_original>
// kernel: attention_layer_primal_cos.1
$region0: #{attention_layer_primal_cos.1}
  #allocation0 [shape = 'u32[]', space=smem, size = 0x4, offset = 0x4, fixed_abs, tag = 'smem constant byte address 0x4 - core index']
  #allocation1 [shape = 'u32[144,128]{1,0:T(1,128)}', space=vmem, size = 0x12000, scoped, tag = 'internal scratch']
  %s0 = inlined_call_operand.vmem [shape: f32[4,16,32], index: 0, kind: input, shape index: {}]
  %s1 = inlined_call_operand.vmem [shape: bf16[32,64], index: 1, kind: input, shape index: {}]
  %s2 = inlined_call_operand.vmem [shape: f32[1,64], index: 2, kind: input, shape index: {}]
  %s3 = inlined_call_operand.vmem [shape: bf16[64,8], index: 3, kind: input, shape index: {}]
  %s4 = inlined_call_operand.vmem [shape: bf16[8,64], index: 4, kind: input, shape index: {}]
  %s5 = inlined_call_operand.vmem [shape: bf16[4,64,40], index: 5, kind: input, shape index: {}]
  %s6 = inlined_call_operand.vmem [shape: bf16[40,32], index: 6, kind: input, shape index: {}]
  %s7 = inlined_call_operand.vmem [shape: f32[1,32], index: 7, kind: input, shape index: {}]
  %s8 = inlined_call_operand.vmem [shape: bf16[32,32], index: 8, kind: input, shape index: {}]
  %s9 = inlined_call_operand.vmem [shape: f32[1,32], index: 9, kind: input, shape index: {}]
  %s10 = inlined_call_operand.vmem [shape: f32[4,16,256], index: 10, kind: output, shape index: {}]
  %s11 = sld [smem:[#allocation0]]
  $region50: #{attention_layer_primal_cos.1} parent=0
    _
  %s13 = ssub.s32 1, %s11
  %s14 = scalar_select 0, %s13, %s11
  // Predicated region
  $region2: #{attention_layer_primal_cos.1} parent=0 // pred_check
    _
  $region3: #{attention_layer_primal_cos.1} parent=0 // pred_check_branch
    %16 = sbr.rel (0) target = $region5
  $region4: #{attention_layer_primal_cos.1} parent=0 // pred_region
    _
  $region5: #{attention_layer_primal_cos.1} parent=0 // pred_fallthru
    _
  // Predicated region
  $region6: #{attention_layer_primal_cos.1} parent=0 // pred_check
    _
  $region7: #{attention_layer_primal_cos.1} parent=0 // pred_check_branch
    %18 = sbr.rel (0) target = $region9
  $region8: #{attention_layer_primal_cos.1} parent=0 // pred_region
    _
  $region9: #{attention_layer_primal_cos.1} parent=0 // pred_fallthru
    _
  // Predicated region
  $region10: #{attention_layer_primal_cos.1} parent=0 // pred_check
    _
  $region11: #{attention_layer_primal_cos.1} parent=0 // pred_check_branch
    %20 = sbr.rel (0) target = $region13
  $region12: #{attention_layer_primal_cos.1} parent=0 // pred_region
    _
  $region13: #{attention_layer_primal_cos.1} parent=0 // pred_fallthru
    _
  // Predicated region
  $region14: #{attention_layer_primal_cos.1} parent=0 // pred_check
    _
  $region15: #{attention_layer_primal_cos.1} parent=0 // pred_check_branch
    %22 = sbr.rel (0) target = $region17
  $region16: #{attention_layer_primal_cos.1} parent=0 // pred_region
    _
  $region17: #{attention_layer_primal_cos.1} parent=0 // pred_fallthru
    _
  // Predicated region
  $region18: #{attention_layer_primal_cos.1} parent=0 // pred_check
    _
  $region19: #{attention_layer_primal_cos.1} parent=0 // pred_check_branch
    %24 = sbr.rel (0) target = $region21
  $region20: #{attention_layer_primal_cos.1} parent=0 // pred_region
    _
  $region21: #{attention_layer_primal_cos.1} parent=0 // pred_fallthru
    _
  // Predicated region
  $region22: #{attention_layer_primal_cos.1} parent=0 // pred_check
    _
  $region23: #{attention_layer_primal_cos.1} parent=0 // pred_check_branch
    %26 = sbr.rel (0) target = $region25
  $region24: #{attention_layer_primal_cos.1} parent=0 // pred_region
    _
  $region25: #{attention_layer_primal_cos.1} parent=0 // pred_fallthru
    _
  // Predicated region
  $region26: #{attention_layer_primal_cos.1} parent=0 // pred_check
    _
  $region27: #{attention_layer_primal_cos.1} parent=0 // pred_check_branch
    %28 = sbr.rel (0) target = $region29
  $region28: #{attention_layer_primal_cos.1} parent=0 // pred_region
    _
  $region29: #{attention_layer_primal_cos.1} parent=0 // pred_fallthru
    _
  // Predicated region
  $region30: #{attention_layer_primal_cos.1} parent=0 // pred_check
    _
  $region31: #{attention_layer_primal_cos.1} parent=0 // pred_check_branch
    %30 = sbr.rel (0) target = $region33
  $region32: #{attention_layer_primal_cos.1} parent=0 // pred_region
    _
  $region33: #{attention_layer_primal_cos.1} parent=0 // pred_fallthru
    _
  // Predicated region
  $region34: #{attention_layer_primal_cos.1} parent=0 // pred_check
    _
  $region35: #{attention_layer_primal_cos.1} parent=0 // pred_check_branch
    %32 = sbr.rel (0) target = $region37
  $region36: #{attention_layer_primal_cos.1} parent=0 // pred_region
    _
  $region37: #{attention_layer_primal_cos.1} parent=0 // pred_fallthru
    _
  // Predicated region
  $region38: #{attention_layer_primal_cos.1} parent=0 // pred_check
    _
  $region39: #{attention_layer_primal_cos.1} parent=0 // pred_check_branch
    %34 = sbr.rel (0) target = $region41
  $region40: #{attention_layer_primal_cos.1} parent=0 // pred_region
    _
  $region41: #{attention_layer_primal_cos.1} parent=0 // pred_fallthru
    _
  %v36 = vld [vmem:[%s0] sm:$0xff]
  %v37 = vld [vmem:[%s0 + $0x8] sm:$0xff]
  %v38 = vld [vmem:[%s0 + $0x10] sm:$0xff]
  %v39 = vld [vmem:[%s0 + $0x18] sm:$0xff]
  %v40 = vld [vmem:[%s0 + $0x20] sm:$0xff]
  %v41 = vld [vmem:[%s0 + $0x28] sm:$0xff]
  %v42 = vld [vmem:[%s0 + $0x30] sm:$0xff]
  %v43 = vld [vmem:[%s0 + $0x38] sm:$0xff]
  %v44 = vpack.c.bf16 %v37, %v36
  %v45 = vpack.c.bf16 %v39, %v38
  %v46 = vpack.c.bf16 %v41, %v40
  %v47 = vpack.c.bf16 %v43, %v42
  %v48 = vld [vmem:[%s1] sm:$0xf]
  %v49 = vld [vmem:[%s1 + $0x4] sm:$0xf]
  %v50 = vld [vmem:[%s1 + $0x8] sm:$0xf]
  %v51 = vld [vmem:[%s1 + $0xc] sm:$0xf]
  %v52 = vld [vmem:[%s2] sm:$0x1]
  %v54 = vlaneseq
  %v55 = vshrl.u32 %v54, 7
  %v56 = vsub.s32 0, %v55
  %v57 = vrot.slane %v52, %v56
  %v63 = vunpack.c.l.b16 %v48
  %v64 = vunpack.c.l.b16 %v49
  %v65 = vunpack.c.l.b16 %v50
  %v66 = vunpack.c.l.b16 %v51
  %v67 = vpack.c.b16 %v64, %v63
  %v68 = vpack.c.b16 %v66, %v65
  %vm71 = vcmask 261120
  %v73 = vsel %vm71, %v44, 0
  %v76 = vsel %vm71, %v45, 0
  %v79 = vsel %vm71, %v46, 0
  %v82 = vsel %vm71, %v47, 0
  %84 = vmatprep.subr.bf16.mxu0 0
  %85 = vmatpush1.bf16.msra.mxu0 %v67
  %86 = vmatprep.subr.bf16.mxu0 0
  %87 = vmatpush1.bf16.msra.mxu0 %v68
  %88 = vmatprep.subr.bf16.mxu0 0
  %89 = vmatpush1.bf16.msra.mxu0 0
  %90 = vmatprep.subr.bf16.mxu0 0
  %91 = vmatpush1.bf16.msra.mxu0 0
  %92 = vmatprep.subr.bf16.mxu0 0
  %93 = vmatpush1.bf16.msra.mxu0 0
  %94 = vmatprep.subr.bf16.mxu0 0
  %95 = vmatpush1.bf16.msra.mxu0 0
  %96 = vmatprep.subr.bf16.mxu0 0
  %97 = vmatpush1.bf16.msra.mxu0 0
  %98 = vmatprep.subr.bf16.mxu0 0
  %99 = vmatpush1.bf16.msra.mxu0 0
  %100 = vmatprep.subr.bf16.mxu0 0
  %101 = vmatpush1.bf16.msra.mxu0 0
  %102 = vmatprep.subr.bf16.mxu0 0
  %103 = vmatpush1.bf16.msra.mxu0 0
  %104 = vmatprep.subr.bf16.mxu0 0
  %105 = vmatpush1.bf16.msra.mxu0 0
  %106 = vmatprep.subr.bf16.mxu0 0
  %107 = vmatpush1.bf16.msra.mxu0 0
  %108 = vmatprep.subr.bf16.mxu0 0
  %109 = vmatpush1.bf16.msra.mxu0 0
  %110 = vmatprep.subr.bf16.mxu0 0
  %111 = vmatpush1.bf16.msra.mxu0 0
  %112 = vmatprep.subr.bf16.mxu0 0
  %113 = vmatpush1.bf16.msra.mxu0 0
  %114 = vmatprep.subr.bf16.mxu0 0
  %115 = vmatpush1.bf16.msra.mxu0 0
  %116 = vmatprep.mubr.bf16.mxu0 0
  %117 = vmatmul.mubr.bf16.gmra.mrb[0].mxu0 %v73
  %v118 = vpop.f32.mrb[0].mxu0
  %v119 = vadd.f32 %v57, %v118
  %v120 = vpop.f32.mrb[0].mxu0
  %v121 = vpop.f32.mrb[0].mxu0
  %v122 = vadd.f32 %v57, %v121
  %v123 = vpop.f32.mrb[0].mxu0
  %124 = vmatprep.mubr.bf16.mxu0 0
  %125 = vmatmul.mubr.bf16.gmra.mrb[0].mxu0 %v76
  %v126 = vpop.f32.mrb[0].mxu0
  %v127 = vadd.f32 %v57, %v126
  %v128 = vpop.f32.mrb[0].mxu0
  %v129 = vpop.f32.mrb[0].mxu0
  %v130 = vadd.f32 %v57, %v129
  %v131 = vpop.f32.mrb[0].mxu0
  %132 = vmatprep.mubr.bf16.mxu0 0
  %133 = vmatmul.mubr.bf16.gmra.mrb[0].mxu0 %v79
  %v134 = vpop.f32.mrb[0].mxu0
  %v135 = vadd.f32 %v57, %v134
  %v136 = vpop.f32.mrb[0].mxu0
  %v137 = vpop.f32.mrb[0].mxu0
  %v138 = vadd.f32 %v57, %v137
  %v139 = vpop.f32.mrb[0].mxu0
  %140 = vmatprep.mubr.bf16.mxu0 0
  %141 = vmatmul.mubr.bf16.gmra.mrb[0].mxu0 %v82
  %v142 = vpop.f32.mrb[0].mxu0
  %v143 = vadd.f32 %v57, %v142
  %v144 = vpop.f32.mrb[0].mxu0
  %v145 = vpop.f32.mrb[0].mxu0
  %v146 = vadd.f32 %v57, %v145
  %v147 = vpop.f32.mrb[0].mxu0
  %148 = vdwg.mxu0
  %v149 = vmul.f32 %v119, %v119
  %v150 = vmul.f32 %v122, %v122
  %v151 = vmul.f32 %v127, %v127
  %v152 = vmul.f32 %v130, %v130
  %v153 = vmul.f32 %v135, %v135
  %v154 = vmul.f32 %v138, %v138
  %v155 = vmul.f32 %v143, %v143
  %v156 = vmul.f32 %v146, %v146
  %v157 = vpack.c.bf16 %v150, %v149
  %v158 = vpack.c.bf16 %v152, %v151
  %v159 = vpack.c.bf16 %v154, %v153
  %v160 = vpack.c.bf16 %v156, %v155
  %v161 = vld [vmem:[%s3] sm:$0xf]
  %v162 = vld [vmem:[%s3 + $0x4] sm:$0xf]
  %v163 = vld [vmem:[%s3 + $0x8] sm:$0xf]
  %v164 = vld [vmem:[%s3 + $0xc] sm:$0xf]
  %v165 = vld [vmem:[%s3 + $0x10] sm:$0xf]
  %v166 = vld [vmem:[%s3 + $0x14] sm:$0xf]
  %v167 = vld [vmem:[%s3 + $0x18] sm:$0xf]
  %v168 = vld [vmem:[%s3 + $0x1c] sm:$0xf]
  %v177 = vunpack.c.l.b16 %v161
  %v178 = vunpack.c.l.b16 %v162
  %v179 = vunpack.c.l.b16 %v163
  %v180 = vunpack.c.l.b16 %v164
  %v181 = vunpack.c.l.b16 %v165
  %v182 = vunpack.c.l.b16 %v166
  %v183 = vunpack.c.l.b16 %v167
  %v184 = vunpack.c.l.b16 %v168
  %v185 = vpack.c.b16 %v178, %v177
  %v186 = vpack.c.b16 %v180, %v179
  %v187 = vpack.c.b16 %v182, %v181
  %v188 = vpack.c.b16 %v184, %v183
  %vm193 = vcmask 523264
  %v195 = vsel %vm193, %v157, 0
  %v198 = vsel %vm193, %v158, 0
  %v201 = vsel %vm193, %v159, 0
  %v204 = vsel %vm193, %v160, 0
  %206 = vmatprep.subr.bf16.mxu0 0
  %207 = vmatpush1.bf16.msra.mxu0 %v185
  %208 = vmatprep.subr.bf16.mxu0 0
  %209 = vmatpush1.bf16.msra.mxu0 %v186
  %210 = vmatprep.subr.bf16.mxu0 0
  %211 = vmatpush1.bf16.msra.mxu0 %v187
  %212 = vmatprep.subr.bf16.mxu0 0
  %213 = vmatpush1.bf16.msra.mxu0 %v188
  %214 = vmatprep.subr.bf16.mxu0 0
  %215 = vmatpush1.bf16.msra.mxu0 0
  %216 = vmatprep.subr.bf16.mxu0 0
  %217 = vmatpush1.bf16.msra.mxu0 0
  %218 = vmatprep.subr.bf16.mxu0 0
  %219 = vmatpush1.bf16.msra.mxu0 0
  %220 = vmatprep.subr.bf16.mxu0 0
  %221 = vmatpush1.bf16.msra.mxu0 0
  %222 = vmatprep.subr.bf16.mxu0 0
  %223 = vmatpush1.bf16.msra.mxu0 0
  %224 = vmatprep.subr.bf16.mxu0 0
  %225 = vmatpush1.bf16.msra.mxu0 0
  %226 = vmatprep.subr.bf16.mxu0 0
  %227 = vmatpush1.bf16.msra.mxu0 0
  %228 = vmatprep.subr.bf16.mxu0 0
  %229 = vmatpush1.bf16.msra.mxu0 0
  %230 = vmatprep.subr.bf16.mxu0 0
  %231 = vmatpush1.bf16.msra.mxu0 0
  %232 = vmatprep.subr.bf16.mxu0 0
  %233 = vmatpush1.bf16.msra.mxu0 0
  %234 = vmatprep.subr.bf16.mxu0 0
  %235 = vmatpush1.bf16.msra.mxu0 0
  %236 = vmatprep.subr.bf16.mxu0 0
  %237 = vmatpush1.bf16.msra.mxu0 0
  %238 = vmatprep.mubr.bf16.mxu0 0
  %239 = vmatmul.mubr.bf16.gmra.mrb[0].mxu0 %v195
  %v240 = vpop.f32.mrb[0].mxu0
  %v241 = vadd.f32 0.0, %v240
  %v242 = vpop.f32.mrb[0].mxu0
  %v243 = vpop.f32.mrb[0].mxu0
  %v244 = vadd.f32 0.0, %v243
  %v245 = vpop.f32.mrb[0].mxu0
  %246 = vmatprep.mubr.bf16.mxu0 0
  %247 = vmatmul.mubr.bf16.gmra.mrb[0].mxu0 %v198
  %v248 = vpop.f32.mrb[0].mxu0
  %v249 = vadd.f32 0.0, %v248
  %v250 = vpop.f32.mrb[0].mxu0
  %v251 = vpop.f32.mrb[0].mxu0
  %v252 = vadd.f32 0.0, %v251
  %v253 = vpop.f32.mrb[0].mxu0
  %254 = vmatprep.mubr.bf16.mxu0 0
  %255 = vmatmul.mubr.bf16.gmra.mrb[0].mxu0 %v201
  %v256 = vpop.f32.mrb[0].mxu0
  %v257 = vadd.f32 0.0, %v256
  %v258 = vpop.f32.mrb[0].mxu0
  %v259 = vpop.f32.mrb[0].mxu0
  %v260 = vadd.f32 0.0, %v259
  %v261 = vpop.f32.mrb[0].mxu0
  %262 = vmatprep.mubr.bf16.mxu0 0
  %263 = vmatmul.mubr.bf16.gmra.mrb[0].mxu0 %v204
  %v264 = vpop.f32.mrb[0].mxu0
  %v265 = vadd.f32 0.0, %v264
  %v266 = vpop.f32.mrb[0].mxu0
  %v267 = vpop.f32.mrb[0].mxu0
  %v268 = vadd.f32 0.0, %v267
  %v269 = vpop.f32.mrb[0].mxu0
  %270 = vdwg.mxu0
  %v271 = vpack.c.bf16 %v244, %v241
  %v272 = vpack.c.bf16 %v252, %v249
  %v273 = vpack.c.bf16 %v260, %v257
  %v274 = vpack.c.bf16 %v268, %v265
  %v275 = vld [vmem:[%s4] sm:$0xf]
  %vm276 = vcmask 64512
  %v278 = vsel %vm276, %v271, 0
  %v281 = vsel %vm276, %v272, 0
  %v284 = vsel %vm276, %v273, 0
  %v287 = vsel %vm276, %v274, 0
  %vm289 = vcmask 1043456
  %v291 = vsel %vm289, %v275, 0
  %293 = vmatprep.subr.bf16.mxu0 0
  %294 = vmatpush1.bf16.msra.mxu0 %v291
  %295 = vmatprep.subr.bf16.mxu0 0
  %296 = vmatpush1.bf16.msra.mxu0 0
  %297 = vmatprep.subr.bf16.mxu0 0
  %298 = vmatpush1.bf16.msra.mxu0 0
  %299 = vmatprep.subr.bf16.mxu0 0
  %300 = vmatpush1.bf16.msra.mxu0 0
  %301 = vmatprep.subr.bf16.mxu0 0
  %302 = vmatpush1.bf16.msra.mxu0 0
  %303 = vmatprep.subr.bf16.mxu0 0
  %304 = vmatpush1.bf16.msra.mxu0 0
  %305 = vmatprep.subr.bf16.mxu0 0
  %306 = vmatpush1.bf16.msra.mxu0 0
  %307 = vmatprep.subr.bf16.mxu0 0
  %308 = vmatpush1.bf16.msra.mxu0 0
  %309 = vmatprep.subr.bf16.mxu0 0
  %310 = vmatpush1.bf16.msra.mxu0 0
  %311 = vmatprep.subr.bf16.mxu0 0
  %312 = vmatpush1.bf16.msra.mxu0 0
  %313 = vmatprep.subr.bf16.mxu0 0
  %314 = vmatpush1.bf16.msra.mxu0 0
  %315 = vmatprep.subr.bf16.mxu0 0
  %316 = vmatpush1.bf16.msra.mxu0 0
  %317 = vmatprep.subr.bf16.mxu0 0
  %318 = vmatpush1.bf16.msra.mxu0 0
  %319 = vmatprep.subr.bf16.mxu0 0
  %320 = vmatpush1.bf16.msra.mxu0 0
  %321 = vmatprep.subr.bf16.mxu0 0
  %322 = vmatpush1.bf16.msra.mxu0 0
  %323 = vmatprep.subr.bf16.mxu0 0
  %324 = vmatpush1.bf16.msra.mxu0 0
  %325 = vmatprep.mubr.bf16.mxu0 0
  %326 = vmatmul.mubr.bf16.gmra.mrb[0].mxu0 %v278
  %v327 = vpop.f32.mrb[0].mxu0
  %v328 = vadd.f32 0.0, %v327
  %v329 = vpop.f32.mrb[0].mxu0
  %v330 = vpop.f32.mrb[0].mxu0
  %v331 = vadd.f32 0.0, %v330
  %v332 = vpop.f32.mrb[0].mxu0
  %333 = vmatprep.mubr.bf16.mxu0 0
  %334 = vmatmul.mubr.bf16.gmra.mrb[0].mxu0 %v281
  %v335 = vpop.f32.mrb[0].mxu0
  %v336 = vadd.f32 0.0, %v335
  %v337 = vpop.f32.mrb[0].mxu0
  %v338 = vpop.f32.mrb[0].mxu0
  %v339 = vadd.f32 0.0, %v338
  %v340 = vpop.f32.mrb[0].mxu0
  %341 = vmatprep.mubr.bf16.mxu0 0
  %342 = vmatmul.mubr.bf16.gmra.mrb[0].mxu0 %v284
  %v343 = vpop.f32.mrb[0].mxu0
  %v344 = vadd.f32 0.0, %v343
  %v345 = vpop.f32.mrb[0].mxu0
  %v346 = vpop.f32.mrb[0].mxu0
  %v347 = vadd.f32 0.0, %v346
  %v348 = vpop.f32.mrb[0].mxu0
  %349 = vmatprep.mubr.bf16.mxu0 0
  %350 = vmatmul.mubr.bf16.gmra.mrb[0].mxu0 %v287
  %v351 = vpop.f32.mrb[0].mxu0
  %v352 = vadd.f32 0.0, %v351
  %v353 = vpop.f32.mrb[0].mxu0
  %v354 = vpop.f32.mrb[0].mxu0
  %v355 = vadd.f32 0.0, %v354
  %v356 = vpop.f32.mrb[0].mxu0
  %357 = vdwg.mxu0
  %v358 = vmax.f32 %v328, 1e-24
  %v359 = vmax.f32 %v331, 1e-24
  %v360 = vmax.f32 %v336, 1e-24
  %v361 = vmax.f32 %v339, 1e-24
  %v362 = vmax.f32 %v344, 1e-24
  %v363 = vmax.f32 %v347, 1e-24
  %v364 = vmax.f32 %v352, 1e-24
  %v365 = vmax.f32 %v355, 1e-24
  %v366 = vrsqrt.pop %v358
  %v367 = vrsqrt.pop %v359
  %v368 = vrsqrt.pop %v360
  %v369 = vrsqrt.pop %v361
  %v370 = vrsqrt.pop %v362
  %v371 = vrsqrt.pop %v363
  %v372 = vrsqrt.pop %v364
  %v373 = vrsqrt.pop %v365
  %v374 = vmul.f32 %v119, %v366
  %v375 = vmul.f32 %v122, %v367
  %v376 = vmul.f32 %v127, %v368
  %v377 = vmul.f32 %v130, %v369
  %v378 = vmul.f32 %v135, %v370
  %v379 = vmul.f32 %v138, %v371
  %v380 = vmul.f32 %v143, %v372
  %v381 = vmul.f32 %v146, %v373
  %v382 = vpack.c.bf16 %v375, %v374
  %v383 = vpack.c.bf16 %v377, %v376
  %v384 = vpack.c.bf16 %v379, %v378
  %v385 = vpack.c.bf16 %v381, %v380
  %v386 = vld [vmem:[%s5] sm:$0xf]
  %v387 = vld [vmem:[%s5 + $0x4] sm:$0xf]
  %v388 = vld [vmem:[%s5 + $0x8] sm:$0xf]
  %v389 = vld [vmem:[%s5 + $0xc] sm:$0xf]
  %v390 = vld [vmem:[%s5 + $0x10] sm:$0xf]
  %v391 = vld [vmem:[%s5 + $0x14] sm:$0xf]
  %v392 = vld [vmem:[%s5 + $0x18] sm:$0xf]
  %v393 = vld [vmem:[%s5 + $0x1c] sm:$0xf]
  %v394 = vld [vmem:[%s5 + $0x20] sm:$0xf]
  %v395 = vld [vmem:[%s5 + $0x24] sm:$0xf]
  %v396 = vld [vmem:[%s5 + $0x28] sm:$0xf]
  %v397 = vld [vmem:[%s5 + $0x2c] sm:$0xf]
  %v398 = vld [vmem:[%s5 + $0x30] sm:$0xf]
  %v399 = vld [vmem:[%s5 + $0x34] sm:$0xf]
  %v400 = vld [vmem:[%s5 + $0x38] sm:$0xf]
  %v401 = vld [vmem:[%s5 + $0x3c] sm:$0xf]
  %v402 = vld [vmem:[%s5 + $0x40] sm:$0xf]
  %v403 = vld [vmem:[%s5 + $0x44] sm:$0xf]
  %v404 = vld [vmem:[%s5 + $0x48] sm:$0xf]
  %v405 = vld [vmem:[%s5 + $0x4c] sm:$0xf]
  %v406 = vld [vmem:[%s5 + $0x50] sm:$0xf]
  %v407 = vld [vmem:[%s5 + $0x54] sm:$0xf]
  %v408 = vld [vmem:[%s5 + $0x58] sm:$0xf]
  %v409 = vld [vmem:[%s5 + $0x5c] sm:$0xf]
  %v410 = vld [vmem:[%s5 + $0x60] sm:$0xf]
  %v411 = vld [vmem:[%s5 + $0x64] sm:$0xf]
  %v412 = vld [vmem:[%s5 + $0x68] sm:$0xf]
  %v413 = vld [vmem:[%s5 + $0x6c] sm:$0xf]
  %v414 = vld [vmem:[%s5 + $0x70] sm:$0xf]
  %v415 = vld [vmem:[%s5 + $0x74] sm:$0xf]
  %v416 = vld [vmem:[%s5 + $0x78] sm:$0xf]
  %v417 = vld [vmem:[%s5 + $0x7c] sm:$0xf]
  %v426 = vunpack.c.l.b16 %v386
  %v427 = vunpack.c.l.b16 %v387
  %v428 = vunpack.c.l.b16 %v388
  %v429 = vunpack.c.l.b16 %v389
  %v430 = vunpack.c.l.b16 %v390
  %v431 = vunpack.c.l.b16 %v391
  %v432 = vunpack.c.l.b16 %v392
  %v433 = vunpack.c.l.b16 %v393
  %v434 = vpack.c.b16 %v427, %v426
  %v435 = vpack.c.b16 %v429, %v428
  %v436 = vpack.c.b16 %v431, %v430
  %v437 = vpack.c.b16 %v433, %v432
  %v443 = vsel %vm193, %v382, 0
  %445 = vmatprep.subr.bf16.mxu0 0
  %446 = vmatpush1.bf16.msra.mxu0 %v434
  %447 = vmatprep.subr.bf16.mxu0 0
  %448 = vmatpush1.bf16.msra.mxu0 %v435
  %449 = vmatprep.subr.bf16.mxu0 0
  %450 = vmatpush1.bf16.msra.mxu0 %v436
  %451 = vmatprep.subr.bf16.mxu0 0
  %452 = vmatpush1.bf16.msra.mxu0 %v437
  %453 = vmatprep.subr.bf16.mxu0 0
  %454 = vmatpush1.bf16.msra.mxu0 0
  %455 = vmatprep.subr.bf16.mxu0 0
  %456 = vmatpush1.bf16.msra.mxu0 0
  %457 = vmatprep.subr.bf16.mxu0 0
  %458 = vmatpush1.bf16.msra.mxu0 0
  %459 = vmatprep.subr.bf16.mxu0 0
  %460 = vmatpush1.bf16.msra.mxu0 0
  %461 = vmatprep.subr.bf16.mxu0 0
  %462 = vmatpush1.bf16.msra.mxu0 0
  %463 = vmatprep.subr.bf16.mxu0 0
  %464 = vmatpush1.bf16.msra.mxu0 0
  %465 = vmatprep.subr.bf16.mxu0 0
  %466 = vmatpush1.bf16.msra.mxu0 0
  %467 = vmatprep.subr.bf16.mxu0 0
  %468 = vmatpush1.bf16.msra.mxu0 0
  %469 = vmatprep.subr.bf16.mxu0 0
  %470 = vmatpush1.bf16.msra.mxu0 0
  %471 = vmatprep.subr.bf16.mxu0 0
  %472 = vmatpush1.bf16.msra.mxu0 0
  %473 = vmatprep.subr.bf16.mxu0 0
  %474 = vmatpush1.bf16.msra.mxu0 0
  %475 = vmatprep.subr.bf16.mxu0 0
  %476 = vmatpush1.bf16.msra.mxu0 0
  %477 = vmatprep.mubr.bf16.mxu0 0
  %478 = vmatmul.mubr.bf16.gmra.mrb[0].mxu0 %v443
  %v479 = vpop.f32.mrb[0].mxu0
  %v480 = vadd.f32 0.0, %v479
  %v481 = vpop.f32.mrb[0].mxu0
  %v482 = vpop.f32.mrb[0].mxu0
  %v483 = vadd.f32 0.0, %v482
  %v484 = vpop.f32.mrb[0].mxu0
  %485 = vdwg.mxu0
  %v494 = vunpack.c.l.b16 %v394
  %v495 = vunpack.c.l.b16 %v395
  %v496 = vunpack.c.l.b16 %v396
  %v497 = vunpack.c.l.b16 %v397
  %v498 = vunpack.c.l.b16 %v398
  %v499 = vunpack.c.l.b16 %v399
  %v500 = vunpack.c.l.b16 %v400
  %v501 = vunpack.c.l.b16 %v401
  %v502 = vpack.c.b16 %v495, %v494
  %v503 = vpack.c.b16 %v497, %v496
  %v504 = vpack.c.b16 %v499, %v498
  %v505 = vpack.c.b16 %v501, %v500
  %v511 = vsel %vm193, %v383, 0
  %513 = vmatprep.subr.bf16.mxu0 0
  %514 = vmatpush1.bf16.msra.mxu0 %v502
  %515 = vmatprep.subr.bf16.mxu0 0
  %516 = vmatpush1.bf16.msra.mxu0 %v503
  %517 = vmatprep.subr.bf16.mxu0 0
  %518 = vmatpush1.bf16.msra.mxu0 %v504
  %519 = vmatprep.subr.bf16.mxu0 0
  %520 = vmatpush1.bf16.msra.mxu0 %v505
  %521 = vmatprep.subr.bf16.mxu0 0
  %522 = vmatpush1.bf16.msra.mxu0 0
  %523 = vmatprep.subr.bf16.mxu0 0
  %524 = vmatpush1.bf16.msra.mxu0 0
  %525 = vmatprep.subr.bf16.mxu0 0
  %526 = vmatpush1.bf16.msra.mxu0 0
  %527 = vmatprep.subr.bf16.mxu0 0
  %528 = vmatpush1.bf16.msra.mxu0 0
  %529 = vmatprep.subr.bf16.mxu0 0
  %530 = vmatpush1.bf16.msra.mxu0 0
  %531 = vmatprep.subr.bf16.mxu0 0
  %532 = vmatpush1.bf16.msra.mxu0 0
  %533 = vmatprep.subr.bf16.mxu0 0
  %534 = vmatpush1.bf16.msra.mxu0 0
  %535 = vmatprep.subr.bf16.mxu0 0
  %536 = vmatpush1.bf16.msra.mxu0 0
  %537 = vmatprep.subr.bf16.mxu0 0
  %538 = vmatpush1.bf16.msra.mxu0 0
  %539 = vmatprep.subr.bf16.mxu0 0
  %540 = vmatpush1.bf16.msra.mxu0 0
  %541 = vmatprep.subr.bf16.mxu0 0
  %542 = vmatpush1.bf16.msra.mxu0 0
  %543 = vmatprep.subr.bf16.mxu0 0
  %544 = vmatpush1.bf16.msra.mxu0 0
  %545 = vmatprep.mubr.bf16.mxu0 0
  %546 = vmatmul.mubr.bf16.gmra.mrb[0].mxu0 %v511
  %v547 = vpop.f32.mrb[0].mxu0
  %v548 = vadd.f32 0.0, %v547
  %v549 = vpop.f32.mrb[0].mxu0
  %v550 = vpop.f32.mrb[0].mxu0
  %v551 = vadd.f32 0.0, %v550
  %v552 = vpop.f32.mrb[0].mxu0
  %553 = vdwg.mxu0
  %v562 = vunpack.c.l.b16 %v402
  %v563 = vunpack.c.l.b16 %v403
  %v564 = vunpack.c.l.b16 %v404
  %v565 = vunpack.c.l.b16 %v405
  %v566 = vunpack.c.l.b16 %v406
  %v567 = vunpack.c.l.b16 %v407
  %v568 = vunpack.c.l.b16 %v408
  %v569 = vunpack.c.l.b16 %v409
  %v570 = vpack.c.b16 %v563, %v562
  %v571 = vpack.c.b16 %v565, %v564
  %v572 = vpack.c.b16 %v567, %v566
  %v573 = vpack.c.b16 %v569, %v568
  %v579 = vsel %vm193, %v384, 0
  %581 = vmatprep.subr.bf16.mxu0 0
  %582 = vmatpush1.bf16.msra.mxu0 %v570
  %583 = vmatprep.subr.bf16.mxu0 0
  %584 = vmatpush1.bf16.msra.mxu0 %v571
  %585 = vmatprep.subr.bf16.mxu0 0
  %586 = vmatpush1.bf16.msra.mxu0 %v572
  %587 = vmatprep.subr.bf16.mxu0 0
  %588 = vmatpush1.bf16.msra.mxu0 %v573
  %589 = vmatprep.subr.bf16.mxu0 0
  %590 = vmatpush1.bf16.msra.mxu0 0
  %591 = vmatprep.subr.bf16.mxu0 0
  %592 = vmatpush1.bf16.msra.mxu0 0
  %593 = vmatprep.subr.bf16.mxu0 0
  %594 = vmatpush1.bf16.msra.mxu0 0
  %595 = vmatprep.subr.bf16.mxu0 0
  %596 = vmatpush1.bf16.msra.mxu0 0
  %597 = vmatprep.subr.bf16.mxu0 0
  %598 = vmatpush1.bf16.msra.mxu0 0
  %599 = vmatprep.subr.bf16.mxu0 0
  %600 = vmatpush1.bf16.msra.mxu0 0
  %601 = vmatprep.subr.bf16.mxu0 0
  %602 = vmatpush1.bf16.msra.mxu0 0
  %603 = vmatprep.subr.bf16.mxu0 0
  %604 = vmatpush1.bf16.msra.mxu0 0
  %605 = vmatprep.subr.bf16.mxu0 0
  %606 = vmatpush1.bf16.msra.mxu0 0
  %607 = vmatprep.subr.bf16.mxu0 0
  %608 = vmatpush1.bf16.msra.mxu0 0
  %609 = vmatprep.subr.bf16.mxu0 0
  %610 = vmatpush1.bf16.msra.mxu0 0
  %611 = vmatprep.subr.bf16.mxu0 0
  %612 = vmatpush1.bf16.msra.mxu0 0
  %613 = vmatprep.mubr.bf16.mxu0 0
  %614 = vmatmul.mubr.bf16.gmra.mrb[0].mxu0 %v579
  %v615 = vpop.f32.mrb[0].mxu0
  %v616 = vadd.f32 0.0, %v615
  %v617 = vpop.f32.mrb[0].mxu0
  %v618 = vpop.f32.mrb[0].mxu0
  %v619 = vadd.f32 0.0, %v618
  %v620 = vpop.f32.mrb[0].mxu0
  %621 = vdwg.mxu0
  %v630 = vunpack.c.l.b16 %v410
  %v631 = vunpack.c.l.b16 %v411
  %v632 = vunpack.c.l.b16 %v412
  %v633 = vunpack.c.l.b16 %v413
  %v634 = vunpack.c.l.b16 %v414
  %v635 = vunpack.c.l.b16 %v415
  %v636 = vunpack.c.l.b16 %v416
  %v637 = vunpack.c.l.b16 %v417
  %v638 = vpack.c.b16 %v631, %v630
  %v639 = vpack.c.b16 %v633, %v632
  %v640 = vpack.c.b16 %v635, %v634
  %v641 = vpack.c.b16 %v637, %v636
  %v647 = vsel %vm193, %v385, 0
  %649 = vmatprep.subr.bf16.mxu0 0
  %650 = vmatpush1.bf16.msra.mxu0 %v638
  %651 = vmatprep.subr.bf16.mxu0 0
  %652 = vmatpush1.bf16.msra.mxu0 %v639
  %653 = vmatprep.subr.bf16.mxu0 0
  %654 = vmatpush1.bf16.msra.mxu0 %v640
  %655 = vmatprep.subr.bf16.mxu0 0
  %656 = vmatpush1.bf16.msra.mxu0 %v641
  %657 = vmatprep.subr.bf16.mxu0 0
  %658 = vmatpush1.bf16.msra.mxu0 0
  %659 = vmatprep.subr.bf16.mxu0 0
  %660 = vmatpush1.bf16.msra.mxu0 0
  %661 = vmatprep.subr.bf16.mxu0 0
  %662 = vmatpush1.bf16.msra.mxu0 0
  %663 = vmatprep.subr.bf16.mxu0 0
  %664 = vmatpush1.bf16.msra.mxu0 0
  %665 = vmatprep.subr.bf16.mxu0 0
  %666 = vmatpush1.bf16.msra.mxu0 0
  %667 = vmatprep.subr.bf16.mxu0 0
  %668 = vmatpush1.bf16.msra.mxu0 0
  %669 = vmatprep.subr.bf16.mxu0 0
  %670 = vmatpush1.bf16.msra.mxu0 0
  %671 = vmatprep.subr.bf16.mxu0 0
  %672 = vmatpush1.bf16.msra.mxu0 0
  %673 = vmatprep.subr.bf16.mxu0 0
  %674 = vmatpush1.bf16.msra.mxu0 0
  %675 = vmatprep.subr.bf16.mxu0 0
  %676 = vmatpush1.bf16.msra.mxu0 0
  %677 = vmatprep.subr.bf16.mxu0 0
  %678 = vmatpush1.bf16.msra.mxu0 0
  %679 = vmatprep.subr.bf16.mxu0 0
  %680 = vmatpush1.bf16.msra.mxu0 0
  %681 = vmatprep.mubr.bf16.mxu0 0
  %682 = vmatmul.mubr.bf16.gmra.mrb[0].mxu0 %v647
  %v683 = vpop.f32.mrb[0].mxu0
  %v684 = vadd.f32 0.0, %v683
  %v685 = vpop.f32.mrb[0].mxu0
  %v686 = vpop.f32.mrb[0].mxu0
  %v687 = vadd.f32 0.0, %v686
  %v688 = vpop.f32.mrb[0].mxu0
  %689 = vdwg.mxu0
  %v690 = vpack.c.bf16 %v483, %v480
  %v691 = vpack.c.bf16 %v551, %v548
  %v692 = vpack.c.bf16 %v619, %v616
  %v693 = vpack.c.bf16 %v687, %v684
  %v694 = vld [vmem:[%s6] sm:$0xf]
  %v695 = vld [vmem:[%s6 + $0x4] sm:$0xf]
  %v696 = vld [vmem:[%s6 + $0x8] sm:$0xf]
  %v697 = vld [vmem:[%s6 + $0xc] sm:$0xf]
  %v698 = vld [vmem:[%s6 + $0x10] sm:$0xf]
  %v699 = vld [vmem:[%s7] sm:$0x1]
  %v701 = vlaneseq
  %v702 = vshrl.u32 %v701, 7
  %v703 = vsub.s32 0, %v702
  %v704 = vrot.slane %v699, %v703
  %v711 = vunpack.c.l.b16 %v694
  %v712 = vunpack.c.l.b16 %v695
  %v713 = vunpack.c.l.b16 %v696
  %v714 = vunpack.c.l.b16 %v697
  %v715 = vunpack.c.l.b16 %v698
  %v716 = vpack.c.b16 %v712, %v711
  %v717 = vpack.c.b16 %v714, %v713
  %v718 = vpack.c.b16 %v715, %v715
  %vm721 = vcmask 326656
  %v723 = vsel %vm721, %v690, 0
  %v726 = vsel %vm721, %v691, 0
  %v729 = vsel %vm721, %v692, 0
  %v732 = vsel %vm721, %v693, 0
  %v735 = vsel %vm289, %v718, 0
  %737 = vmatprep.subr.bf16.mxu0 0
  %738 = vmatpush1.bf16.msra.mxu0 %v716
  %739 = vmatprep.subr.bf16.mxu0 0
  %740 = vmatpush1.bf16.msra.mxu0 %v717
  %741 = vmatprep.subr.bf16.mxu0 0
  %742 = vmatpush1.bf16.msra.mxu0 %v735
  %743 = vmatprep.subr.bf16.mxu0 0
  %744 = vmatpush1.bf16.msra.mxu0 0
  %745 = vmatprep.subr.bf16.mxu0 0
  %746 = vmatpush1.bf16.msra.mxu0 0
  %747 = vmatprep.subr.bf16.mxu0 0
  %748 = vmatpush1.bf16.msra.mxu0 0
  %749 = vmatprep.subr.bf16.mxu0 0
  %750 = vmatpush1.bf16.msra.mxu0 0
  %751 = vmatprep.subr.bf16.mxu0 0
  %752 = vmatpush1.bf16.msra.mxu0 0
  %753 = vmatprep.subr.bf16.mxu0 0
  %754 = vmatpush1.bf16.msra.mxu0 0
  %755 = vmatprep.subr.bf16.mxu0 0
  %756 = vmatpush1.bf16.msra.mxu0 0
  %757 = vmatprep.subr.bf16.mxu0 0
  %758 = vmatpush1.bf16.msra.mxu0 0
  %759 = vmatprep.subr.bf16.mxu0 0
  %760 = vmatpush1.bf16.msra.mxu0 0
  %761 = vmatprep.subr.bf16.mxu0 0
  %762 = vmatpush1.bf16.msra.mxu0 0
  %763 = vmatprep.subr.bf16.mxu0 0
  %764 = vmatpush1.bf16.msra.mxu0 0
  %765 = vmatprep.subr.bf16.mxu0 0
  %766 = vmatpush1.bf16.msra.mxu0 0
  %767 = vmatprep.subr.bf16.mxu0 0
  %768 = vmatpush1.bf16.msra.mxu0 0
  %769 = vmatprep.mubr.bf16.mxu0 0
  %770 = vmatmul.mubr.bf16.gmra.mrb[0].mxu0 %v723
  %v771 = vpop.f32.mrb[0].mxu0
  %v772 = vadd.f32 %v704, %v771
  %v773 = vpop.f32.mrb[0].mxu0
  %v774 = vpop.f32.mrb[0].mxu0
  %v775 = vadd.f32 %v704, %v774
  %v776 = vpop.f32.mrb[0].mxu0
  %777 = vmatprep.mubr.bf16.mxu0 0
  %778 = vmatmul.mubr.bf16.gmra.mrb[0].mxu0 %v726
  %v779 = vpop.f32.mrb[0].mxu0
  %v780 = vadd.f32 %v704, %v779
  %v781 = vpop.f32.mrb[0].mxu0
  %v782 = vpop.f32.mrb[0].mxu0
  %v783 = vadd.f32 %v704, %v782
  %v784 = vpop.f32.mrb[0].mxu0
  %785 = vmatprep.mubr.bf16.mxu0 0
  %786 = vmatmul.mubr.bf16.gmra.mrb[0].mxu0 %v729
  %v787 = vpop.f32.mrb[0].mxu0
  %v788 = vadd.f32 %v704, %v787
  %v789 = vpop.f32.mrb[0].mxu0
  %v790 = vpop.f32.mrb[0].mxu0
  %v791 = vadd.f32 %v704, %v790
  %v792 = vpop.f32.mrb[0].mxu0
  %793 = vmatprep.mubr.bf16.mxu0 0
  %794 = vmatmul.mubr.bf16.gmra.mrb[0].mxu0 %v732
  %v795 = vpop.f32.mrb[0].mxu0
  %v796 = vadd.f32 %v704, %v795
  %v797 = vpop.f32.mrb[0].mxu0
  %v798 = vpop.f32.mrb[0].mxu0
  %v799 = vadd.f32 %v704, %v798
  %v800 = vpop.f32.mrb[0].mxu0
  %801 = vdwg.mxu0
  %v802 = vpack.c.bf16 %v775, %v772
  %v803 = vpack.c.bf16 %v783, %v780
  %v804 = vpack.c.bf16 %v791, %v788
  %v805 = vpack.c.bf16 %v799, %v796
  %v806 = vld [vmem:[%s8] sm:$0xf]
  %v807 = vld [vmem:[%s8 + $0x4] sm:$0xf]
  %v808 = vld [vmem:[%s8 + $0x8] sm:$0xf]
  %v809 = vld [vmem:[%s8 + $0xc] sm:$0xf]
  %v810 = vld [vmem:[%s9] sm:$0x1]
  %v812 = vlaneseq
  %v813 = vshrl.u32 %v812, 7
  %v814 = vsub.s32 0, %v813
  %v815 = vrot.slane %v810, %v814
  %v821 = vunpack.c.l.b16 %v806
  %v822 = vunpack.c.l.b16 %v807
  %v823 = vunpack.c.l.b16 %v808
  %v824 = vunpack.c.l.b16 %v809
  %v825 = vpack.c.b16 %v822, %v821
  %v826 = vpack.c.b16 %v824, %v823
  %v830 = vsel %vm71, %v802, 0
  %v833 = vsel %vm71, %v803, 0
  %v836 = vsel %vm71, %v804, 0
  %v839 = vsel %vm71, %v805, 0
  %841 = vmatprep.subr.bf16.mxu0 0
  %842 = vmatpush1.bf16.msra.mxu0 %v825
  %843 = vmatprep.subr.bf16.mxu0 0
  %844 = vmatpush1.bf16.msra.mxu0 %v826
  %845 = vmatprep.subr.bf16.mxu0 0
  %846 = vmatpush1.bf16.msra.mxu0 0
  %847 = vmatprep.subr.bf16.mxu0 0
  %848 = vmatpush1.bf16.msra.mxu0 0
  %849 = vmatprep.subr.bf16.mxu0 0
  %850 = vmatpush1.bf16.msra.mxu0 0
  %851 = vmatprep.subr.bf16.mxu0 0
  %852 = vmatpush1.bf16.msra.mxu0 0
  %853 = vmatprep.subr.bf16.mxu0 0
  %854 = vmatpush1.bf16.msra.mxu0 0
  %855 = vmatprep.subr.bf16.mxu0 0
  %856 = vmatpush1.bf16.msra.mxu0 0
  %857 = vmatprep.subr.bf16.mxu0 0
  %858 = vmatpush1.bf16.msra.mxu0 0
  %859 = vmatprep.subr.bf16.mxu0 0
  %860 = vmatpush1.bf16.msra.mxu0 0
  %861 = vmatprep.subr.bf16.mxu0 0
  %862 = vmatpush1.bf16.msra.mxu0 0
  %863 = vmatprep.subr.bf16.mxu0 0
  %864 = vmatpush1.bf16.msra.mxu0 0
  %865 = vmatprep.subr.bf16.mxu0 0
  %866 = vmatpush1.bf16.msra.mxu0 0
  %867 = vmatprep.subr.bf16.mxu0 0
  %868 = vmatpush1.bf16.msra.mxu0 0
  %869 = vmatprep.subr.bf16.mxu0 0
  %870 = vmatpush1.bf16.msra.mxu0 0
  %871 = vmatprep.subr.bf16.mxu0 0
  %872 = vmatpush1.bf16.msra.mxu0 0
  %873 = vmatprep.mubr.bf16.mxu0 0
  %874 = vmatmul.mubr.bf16.gmra.mrb[0].mxu0 %v830
  %v875 = vpop.f32.mrb[0].mxu0
  %v876 = vadd.f32 %v815, %v875
  %v877 = vpop.f32.mrb[0].mxu0
  %v878 = vpop.f32.mrb[0].mxu0
  %v879 = vadd.f32 %v815, %v878
  %v880 = vpop.f32.mrb[0].mxu0
  %881 = vmatprep.mubr.bf16.mxu0 0
  %882 = vmatmul.mubr.bf16.gmra.mrb[0].mxu0 %v833
  %v883 = vpop.f32.mrb[0].mxu0
  %v884 = vadd.f32 %v815, %v883
  %v885 = vpop.f32.mrb[0].mxu0
  %v886 = vpop.f32.mrb[0].mxu0
  %v887 = vadd.f32 %v815, %v886
  %v888 = vpop.f32.mrb[0].mxu0
  %889 = vmatprep.mubr.bf16.mxu0 0
  %890 = vmatmul.mubr.bf16.gmra.mrb[0].mxu0 %v836
  %v891 = vpop.f32.mrb[0].mxu0
  %v892 = vadd.f32 %v815, %v891
  %v893 = vpop.f32.mrb[0].mxu0
  %v894 = vpop.f32.mrb[0].mxu0
  %v895 = vadd.f32 %v815, %v894
  %v896 = vpop.f32.mrb[0].mxu0
  %897 = vmatprep.mubr.bf16.mxu0 0
  %898 = vmatmul.mubr.bf16.gmra.mrb[0].mxu0 %v839
  %v899 = vpop.f32.mrb[0].mxu0
  %v900 = vadd.f32 %v815, %v899
  %v901 = vpop.f32.mrb[0].mxu0
  %v902 = vpop.f32.mrb[0].mxu0
  %v903 = vadd.f32 %v815, %v902
  %v904 = vpop.f32.mrb[0].mxu0
  %905 = vdwg.mxu0
  %914 = vrot.lane.b32.xlu0 %v480, 32
  %v915 = vpop.permute.xlu0 %914
  %916 = vrot.lane.b32.xlu0 %v483, 32
  %v917 = vpop.permute.xlu0 %916
  %918 = vrot.lane.b32.xlu0 %v548, 32
  %v919 = vpop.permute.xlu0 %918
  %920 = vrot.lane.b32.xlu0 %v551, 32
  %v921 = vpop.permute.xlu0 %920
  %922 = vrot.lane.b32.xlu0 %v616, 32
  %v923 = vpop.permute.xlu0 %922
  %924 = vrot.lane.b32.xlu0 %v619, 32
  %v925 = vpop.permute.xlu0 %924
  %926 = vrot.lane.b32.xlu0 %v684, 32
  %v927 = vpop.permute.xlu0 %926
  %928 = vrot.lane.b32.xlu0 %v687, 32
  %v929 = vpop.permute.xlu0 %928
  %946 = vrot.lane.b32.xlu0 %v374, 72
  %v947 = vpop.permute.xlu0 %946
  %948 = vrot.lane.b32.xlu0 %v375, 72
  %v949 = vpop.permute.xlu0 %948
  %950 = vrot.lane.b32.xlu0 %v376, 72
  %v951 = vpop.permute.xlu0 %950
  %952 = vrot.lane.b32.xlu0 %v377, 72
  %v953 = vpop.permute.xlu0 %952
  %954 = vrot.lane.b32.xlu0 %v378, 72
  %v955 = vpop.permute.xlu0 %954
  %956 = vrot.lane.b32.xlu0 %v379, 72
  %v957 = vpop.permute.xlu0 %956
  %958 = vrot.lane.b32.xlu0 %v380, 72
  %v959 = vpop.permute.xlu0 %958
  %960 = vrot.lane.b32.xlu0 %v381, 72
  %v961 = vpop.permute.xlu0 %960
  %v970 = vsel %vm71, %v876, %v915
  %v971 = vsel %vm71, %v879, %v917
  %v972 = vsel %vm71, %v884, %v919
  %v973 = vsel %vm71, %v887, %v921
  %v974 = vsel %vm71, %v892, %v923
  %v975 = vsel %vm71, %v895, %v925
  %v976 = vsel %vm71, %v900, %v927
  %v977 = vsel %vm71, %v903, %v929
  %vm978 = vcmask 588800
  %v979 = vsel %vm978, %v970, %v947
  %v980 = vsel %vm978, %v971, %v949
  %v981 = vsel %vm978, %v972, %v951
  %v982 = vsel %vm978, %v973, %v953
  %v983 = vsel %vm978, %v974, %v955
  %v984 = vsel %vm978, %v975, %v957
  %v985 = vsel %vm978, %v976, %v959
  %v986 = vsel %vm978, %v977, %v961
  %v987 = vsel %vm276, %v947, 0.0
  %v988 = vsel %vm276, %v949, 0.0
  %v989 = vsel %vm276, %v951, 0.0
  %v990 = vsel %vm276, %v953, 0.0
  %v991 = vsel %vm276, %v955, 0.0
  %v992 = vsel %vm276, %v957, 0.0
  %v993 = vsel %vm276, %v959, 0.0
  %v994 = vsel %vm276, %v961, 0.0
  %995 = vst [vmem:[%s10] sm:$0xff] %v979
  %996 = vst [vmem:[%s10 + $0x8] sm:$0xff] %v987
  %997 = vst [vmem:[%s10 + $0x10] sm:$0xff] %v980
  %998 = vst [vmem:[%s10 + $0x18] sm:$0xff] %v988
  %999 = vst [vmem:[%s10 + $0x20] sm:$0xff] %v981
  %1000 = vst [vmem:[%s10 + $0x28] sm:$0xff] %v989
  %1001 = vst [vmem:[%s10 + $0x30] sm:$0xff] %v982
  %1002 = vst [vmem:[%s10 + $0x38] sm:$0xff] %v990
  %1003 = vst [vmem:[%s10 + $0x40] sm:$0xff] %v983
  %1004 = vst [vmem:[%s10 + $0x48] sm:$0xff] %v991
  %1005 = vst [vmem:[%s10 + $0x50] sm:$0xff] %v984
  %1006 = vst [vmem:[%s10 + $0x58] sm:$0xff] %v992
  %1007 = vst [vmem:[%s10 + $0x60] sm:$0xff] %v985
  %1008 = vst [vmem:[%s10 + $0x68] sm:$0xff] %v993
  %1009 = vst [vmem:[%s10 + $0x70] sm:$0xff] %v986
  %1010 = vst [vmem:[%s10 + $0x78] sm:$0xff] %v994
  // Predicated region
  $region42: #{attention_layer_primal_cos.1} parent=0 // pred_check
    _
  $region43: #{attention_layer_primal_cos.1} parent=0 // pred_check_branch
    %1012 = sbr.rel (0) target = $region45
  $region44: #{attention_layer_primal_cos.1} parent=0 // pred_region
    _
  $region45: #{attention_layer_primal_cos.1} parent=0 // pred_fallthru
    _
  // Predicated region
  $region46: #{attention_layer_primal_cos.1} parent=0 // pred_check
    _
  $region47: #{attention_layer_primal_cos.1} parent=0 // pred_check_branch
    %1014 = sbr.rel (0) target = $region49
  $region48: #{attention_layer_primal_cos.1} parent=0 // pred_region
    _
  $region49: #{attention_layer_primal_cos.1} parent=0 // pred_fallthru
    _

// kernel: attention_layer_primal_cos.1
$region0: #{attention_layer_primal_cos.1}
  #allocation0 [shape = 'u32[]', space=smem, size = 0x4, offset = 0x4, fixed_abs, tag = 'smem constant byte address 0x4 - core index']
  #allocation1 [shape = 'u32[144,128]{1,0:T(1,128)}', space=vmem, size = 0x12000, scoped, tag = 'internal scratch']
  %s0 = inlined_call_operand.vmem [shape: f32[4,16,32], index: 0, kind: input, shape index: {}]
  %s1 = inlined_call_operand.vmem [shape: bf16[32,64], index: 1, kind: input, shape index: {}]
  %s2 = inlined_call_operand.vmem [shape: f32[1,64], index: 2, kind: input, shape index: {}]
  %s3 = inlined_call_operand.vmem [shape: bf16[64,8], index: 3, kind: input, shape index: {}]
  %s4 = inlined_call_operand.vmem [shape: bf16[8,64], index: 4, kind: input, shape index: {}]
  %s5 = inlined_call_operand.vmem [shape: bf16[4,64,40], index: 5, kind: input, shape index: {}]
  %s6 = inlined_call_operand.vmem [shape: bf16[40,32], index: 6, kind: input, shape index: {}]
  %s7 = inlined_call_operand.vmem [shape: f32[1,32], index: 7, kind: input, shape index: {}]
  %s8 = inlined_call_operand.vmem [shape: bf16[32,32], index: 8, kind: input, shape index: {}]
  %s9 = inlined_call_operand.vmem [shape: f32[1,32], index: 9, kind: input, shape index: {}]
  %s10 = inlined_call_operand.vmem [shape: f32[4,16,256], index: 10, kind: output, shape index: {}]
  %s11 = sld [smem:[#allocation0]]
  $region50: #{attention_layer_primal_cos.1} parent=0
    _
  %s13 = ssub.s32 1, %s11
  %s14 = scalar_select 0, %s13, %s11
  // Predicated region
  $region2: #{attention_layer_primal_cos.1} parent=0 // pred_check
    _
  $region3: #{attention_layer_primal_cos.1} parent=0 // pred_check_branch
    %16 = sbr.rel (0) target = $region5
  $region4: #{attention_layer_primal_cos.1} parent=0 // pred_region
    _
  $region5: #{attention_layer_primal_cos.1} parent=0 // pred_fallthru
    _
  // Predicated region
  $region6: #{attention_layer_primal_cos.1} parent=0 // pred_check
    _
  $region7: #{attention_layer_primal_cos.1} parent=0 // pred_check_branch
    %18 = sbr.rel (0) target = $region9
  $region8: #{attention_layer_primal_cos.1} parent=0 // pred_region
    _
  $region9: #{attention_layer_primal_cos.1} parent=0 // pred_fallthru
    _
  // Predicated region
  $region10: #{attention_layer_primal_cos.1} parent=0 // pred_check
    _
  $region11: #{attention_layer_primal_cos.1} parent=0 // pred_check_branch
    %20 = sbr.rel (0) target = $region13
  $region12: #{attention_layer_primal_cos.1} parent=0 // pred_region
    _
  $region13: #{attention_layer_primal_cos.1} parent=0 // pred_fallthru
    _
  // Predicated region
  $region14: #{attention_layer_primal_cos.1} parent=0 // pred_check
    _
  $region15: #{attention_layer_primal_cos.1} parent=0 // pred_check_branch
    %22 = sbr.rel (0) target = $region17
  $region16: #{attention_layer_primal_cos.1} parent=0 // pred_region
    _
  $region17: #{attention_layer_primal_cos.1} parent=0 // pred_fallthru
    _
  // Predicated region
  $region18: #{attention_layer_primal_cos.1} parent=0 // pred_check
    _
  $region19: #{attention_layer_primal_cos.1} parent=0 // pred_check_branch
    %24 = sbr.rel (0) target = $region21
  $region20: #{attention_layer_primal_cos.1} parent=0 // pred_region
    _
  $region21: #{attention_layer_primal_cos.1} parent=0 // pred_fallthru
    _
  // Predicated region
  $region22: #{attention_layer_primal_cos.1} parent=0 // pred_check
    _
  $region23: #{attention_layer_primal_cos.1} parent=0 // pred_check_branch
    %26 = sbr.rel (0) target = $region25
  $region24: #{attention_layer_primal_cos.1} parent=0 // pred_region
    _
  $region25: #{attention_layer_primal_cos.1} parent=0 // pred_fallthru
    _
  // Predicated region
  $region26: #{attention_layer_primal_cos.1} parent=0 // pred_check
    _
  $region27: #{attention_layer_primal_cos.1} parent=0 // pred_check_branch
    %28 = sbr.rel (0) target = $region29
  $region28: #{attention_layer_primal_cos.1} parent=0 // pred_region
    _
  $region29: #{attention_layer_primal_cos.1} parent=0 // pred_fallthru
    _
  // Predicated region
  $region30: #{attention_layer_primal_cos.1} parent=0 // pred_check
    _
  $region31: #{attention_layer_primal_cos.1} parent=0 // pred_check_branch
    %30 = sbr.rel (0) target = $region33
  $region32: #{attention_layer_primal_cos.1} parent=0 // pred_region
    _
  $region33: #{attention_layer_primal_cos.1} parent=0 // pred_fallthru
    _
  // Predicated region
  $region34: #{attention_layer_primal_cos.1} parent=0 // pred_check
    _
  $region35: #{attention_layer_primal_cos.1} parent=0 // pred_check_branch
    %32 = sbr.rel (0) target = $region37
  $region36: #{attention_layer_primal_cos.1} parent=0 // pred_region
    _
  $region37: #{attention_layer_primal_cos.1} parent=0 // pred_fallthru
    _
  // Predicated region
  $region38: #{attention_layer_primal_cos.1} parent=0 // pred_check
    _
  $region39: #{attention_layer_primal_cos.1} parent=0 // pred_check_branch
    %34 = sbr.rel (0) target = $region41
  $region40: #{attention_layer_primal_cos.1} parent=0 // pred_region
    _
  $region41: #{attention_layer_primal_cos.1} parent=0 // pred_fallthru
    _
  %v36 = vld [vmem:[%s0] sm:$0xff]
  %v37 = vld [vmem:[%s0 + $0x8] sm:$0xff]
  %v38 = vld [vmem:[%s0 + $0x10] sm:$0xff]
  %v39 = vld [vmem:[%s0 + $0x18] sm:$0xff]
  %v40 = vld [vmem:[%s0 + $0x20] sm:$0xff]
  %v41 = vld [vmem:[%s0 + $0x28] sm:$0xff]
  %v42 = vld [vmem:[%s0 + $0x30] sm:$0xff]
  %v43 = vld [vmem:[%s0 + $0x38] sm:$0xff]
  %v44 = vpack.c.bf16 %v37, %v36
  %v45 = vpack.c.bf16 %v39, %v38
  %v46 = vpack.c.bf16 %v41, %v40
  %v47 = vpack.c.bf16 %v43, %v42
  %v48 = vld [vmem:[%s1] sm:$0xf]
  %v49 = vld [vmem:[%s1 + $0x4] sm:$0xf]
  %v50 = vld [vmem:[%s1 + $0x8] sm:$0xf]
  %v51 = vld [vmem:[%s1 + $0xc] sm:$0xf]
  %v52 = vld [vmem:[%s2] sm:$0x1]
  %v54 = vlaneseq
  %v55 = vshrl.u32 %v54, 7
  %v56 = vsub.s32 0, %v55
  %v57 = vrot.slane %v52, %v56
  %v63 = vunpack.c.l.b16 %v48
  %v64 = vunpack.c.l.b16 %v49
  %v65 = vunpack.c.l.b16 %v50
  %v66 = vunpack.c.l.b16 %v51
  %v67 = vpack.c.b16 %v64, %v63
  %v68 = vpack.c.b16 %v66, %v65
  %vm71 = vcmask 261120
  %v73 = vsel %vm71, %v44, 0
  %v76 = vsel %vm71, %v45, 0
  %v79 = vsel %vm71, %v46, 0
  %v82 = vsel %vm71, %v47, 0
  %84 = vmatprep.subr.bf16.mxu0 0
  %85 = vmatpush1.bf16.msra.mxu0 %v67
  %86 = vmatprep.subr.bf16.mxu0 0
  %87 = vmatpush1.bf16.msra.mxu0 %v68
  %88 = vmatprep.subr.bf16.mxu0 0
  %89 = vmatpush1.bf16.msra.mxu0 0
  %90 = vmatprep.subr.bf16.mxu0 0
  %91 = vmatpush1.bf16.msra.mxu0 0
  %92 = vmatprep.subr.bf16.mxu0 0
  %93 = vmatpush1.bf16.msra.mxu0 0
  %94 = vmatprep.subr.bf16.mxu0 0
  %95 = vmatpush1.bf16.msra.mxu0 0
  %96 = vmatprep.subr.bf16.mxu0 0
  %97 = vmatpush1.bf16.msra.mxu0 0
  %98 = vmatprep.subr.bf16.mxu0 0
  %99 = vmatpush1.bf16.msra.mxu0 0
  %100 = vmatprep.subr.bf16.mxu0 0
  %101 = vmatpush1.bf16.msra.mxu0 0
  %102 = vmatprep.subr.bf16.mxu0 0
  %103 = vmatpush1.bf16.msra.mxu0 0
  %104 = vmatprep.subr.bf16.mxu0 0
  %105 = vmatpush1.bf16.msra.mxu0 0
  %106 = vmatprep.subr.bf16.mxu0 0
  %107 = vmatpush1.bf16.msra.mxu0 0
  %108 = vmatprep.subr.bf16.mxu0 0
  %109 = vmatpush1.bf16.msra.mxu0 0
  %110 = vmatprep.subr.bf16.mxu0 0
  %111 = vmatpush1.bf16.msra.mxu0 0
  %112 = vmatprep.subr.bf16.mxu0 0
  %113 = vmatpush1.bf16.msra.mxu0 0
  %114 = vmatprep.subr.bf16.mxu0 0
  %115 = vmatpush1.bf16.msra.mxu0 0
  %116 = vmatprep.mubr.bf16.mxu0 0
  %117 = vmatmul.mubr.bf16.gmra.mrb[0].mxu0 %v73
  %v118 = vpop.f32.mrb[0].mxu0
  %v119 = vadd.f32 %v57, %v118
  %v120 = vpop.f32.mrb[0].mxu0
  %v121 = vpop.f32.mrb[0].mxu0
  %v122 = vadd.f32 %v57, %v121
  %v123 = vpop.f32.mrb[0].mxu0
  %124 = vmatprep.mubr.bf16.mxu0 0
  %125 = vmatmul.mubr.bf16.gmra.mrb[0].mxu0 %v76
  %v126 = vpop.f32.mrb[0].mxu0
  %v127 = vadd.f32 %v57, %v126
  %v128 = vpop.f32.mrb[0].mxu0
  %v129 = vpop.f32.mrb[0].mxu0
  %v130 = vadd.f32 %v57, %v129
  %v131 = vpop.f32.mrb[0].mxu0
  %132 = vmatprep.mubr.bf16.mxu0 0
  %133 = vmatmul.mubr.bf16.gmra.mrb[0].mxu0 %v79
  %v134 = vpop.f32.mrb[0].mxu0
  %v135 = vadd.f32 %v57, %v134
  %v136 = vpop.f32.mrb[0].mxu0
  %v137 = vpop.f32.mrb[0].mxu0
  %v138 = vadd.f32 %v57, %v137
  %v139 = vpop.f32.mrb[0].mxu0
  %140 = vmatprep.mubr.bf16.mxu0 0
  %141 = vmatmul.mubr.bf16.gmra.mrb[0].mxu0 %v82
  %v142 = vpop.f32.mrb[0].mxu0
  %v143 = vadd.f32 %v57, %v142
  %v144 = vpop.f32.mrb[0].mxu0
  %v145 = vpop.f32.mrb[0].mxu0
  %v146 = vadd.f32 %v57, %v145
  %v147 = vpop.f32.mrb[0].mxu0
  %148 = vdwg.mxu0
  %v149 = vmul.f32 %v119, %v119
  %v150 = vmul.f32 %v122, %v122
  %v151 = vmul.f32 %v127, %v127
  %v152 = vmul.f32 %v130, %v130
  %v153 = vmul.f32 %v135, %v135
  %v154 = vmul.f32 %v138, %v138
  %v155 = vmul.f32 %v143, %v143
  %v156 = vmul.f32 %v146, %v146
  %v157 = vpack.c.bf16 %v150, %v149
  %v158 = vpack.c.bf16 %v152, %v151
  %v159 = vpack.c.bf16 %v154, %v153
  %v160 = vpack.c.bf16 %v156, %v155
  %v161 = vld [vmem:[%s3] sm:$0xf]
  %v162 = vld [vmem:[%s3 + $0x4] sm:$0xf]
  %v163 = vld [vmem:[%s3 + $0x8] sm:$0xf]
  %v164 = vld [vmem:[%s3 + $0xc] sm:$0xf]
  %v165 = vld [vmem:[%s3 + $0x10] sm:$0xf]
  %v166 = vld [vmem:[%s3 + $0x14] sm:$0xf]
  %v167 = vld [vmem:[%s3 + $0x18] sm:$0xf]
  %v168 = vld [vmem:[%s3 + $0x1c] sm:$0xf]
  %v177 = vunpack.c.l.b16 %v161
  %v178 = vunpack.c.l.b16 %v162
  %v179 = vunpack.c.l.b16 %v163
  %v180 = vunpack.c.l.b16 %v164
  %v181 = vunpack.c.l.b16 %v165
  %v182 = vunpack.c.l.b16 %v166
  %v183 = vunpack.c.l.b16 %v167
  %v184 = vunpack.c.l.b16 %v168
  %v185 = vpack.c.b16 %v178, %v177
  %v186 = vpack.c.b16 %v180, %v179
  %v187 = vpack.c.b16 %v182, %v181
  %v188 = vpack.c.b16 %v184, %v183
  %vm193 = vcmask 523264
  %v195 = vsel %vm193, %v157, 0
  %v198 = vsel %vm193, %v158, 0
  %v201 = vsel %vm193, %v159, 0
  %v204 = vsel %vm193, %v160, 0
  %206 = vmatprep.subr.bf16.mxu0 0
  %207 = vmatpush1.bf16.msra.mxu0 %v185
  %208 = vmatprep.subr.bf16.mxu0 0
  %209 = vmatpush1.bf16.msra.mxu0 %v186
  %210 = vmatprep.subr.bf16.mxu0 0
  %211 = vmatpush1.bf16.msra.mxu0 %v187
  %212 = vmatprep.subr.bf16.mxu0 0
  %213 = vmatpush1.bf16.msra.mxu0 %v188
  %214 = vmatprep.subr.bf16.mxu0 0
  %215 = vmatpush1.bf16.msra.mxu0 0
  %216 = vmatprep.subr.bf16.mxu0 0
  %217 = vmatpush1.bf16.msra.mxu0 0
  %218 = vmatprep.subr.bf16.mxu0 0
  %219 = vmatpush1.bf16.msra.mxu0 0
  %220 = vmatprep.subr.bf16.mxu0 0
  %221 = vmatpush1.bf16.msra.mxu0 0
  %222 = vmatprep.subr.bf16.mxu0 0
  %223 = vmatpush1.bf16.msra.mxu0 0
  %224 = vmatprep.subr.bf16.mxu0 0
  %225 = vmatpush1.bf16.msra.mxu0 0
  %226 = vmatprep.subr.bf16.mxu0 0
  %227 = vmatpush1.bf16.msra.mxu0 0
  %228 = vmatprep.subr.bf16.mxu0 0
  %229 = vmatpush1.bf16.msra.mxu0 0
  %230 = vmatprep.subr.bf16.mxu0 0
  %231 = vmatpush1.bf16.msra.mxu0 0
  %232 = vmatprep.subr.bf16.mxu0 0
  %233 = vmatpush1.bf16.msra.mxu0 0
  %234 = vmatprep.subr.bf16.mxu0 0
  %235 = vmatpush1.bf16.msra.mxu0 0
  %236 = vmatprep.subr.bf16.mxu0 0
  %237 = vmatpush1.bf16.msra.mxu0 0
  %238 = vmatprep.mubr.bf16.mxu0 0
  %239 = vmatmul.mubr.bf16.gmra.mrb[0].mxu0 %v195
  %v240 = vpop.f32.mrb[0].mxu0
  %v241 = vadd.f32 0.0, %v240
  %v242 = vpop.f32.mrb[0].mxu0
  %v243 = vpop.f32.mrb[0].mxu0
  %v244 = vadd.f32 0.0, %v243
  %v245 = vpop.f32.mrb[0].mxu0
  %246 = vmatprep.mubr.bf16.mxu0 0
  %247 = vmatmul.mubr.bf16.gmra.mrb[0].mxu0 %v198
  %v248 = vpop.f32.mrb[0].mxu0
  %v249 = vadd.f32 0.0, %v248
  %v250 = vpop.f32.mrb[0].mxu0
  %v251 = vpop.f32.mrb[0].mxu0
  %v252 = vadd.f32 0.0, %v251
  %v253 = vpop.f32.mrb[0].mxu0
  %254 = vmatprep.mubr.bf16.mxu0 0
  %255 = vmatmul.mubr.bf16.gmra.mrb[0].mxu0 %v201
  %v256 = vpop.f32.mrb[0].mxu0
  %v257 = vadd.f32 0.0, %v256
  %v258 = vpop.f32.mrb[0].mxu0
  %v259 = vpop.f32.mrb[0].mxu0
  %v260 = vadd.f32 0.0, %v259
  %v261 = vpop.f32.mrb[0].mxu0
  %262 = vmatprep.mubr.bf16.mxu0 0
  %263 = vmatmul.mubr.bf16.gmra.mrb[0].mxu0 %v204
  %v264 = vpop.f32.mrb[0].mxu0
  %v265 = vadd.f32 0.0, %v264
  %v266 = vpop.f32.mrb[0].mxu0
  %v267 = vpop.f32.mrb[0].mxu0
  %v268 = vadd.f32 0.0, %v267
  %v269 = vpop.f32.mrb[0].mxu0
  %270 = vdwg.mxu0
  %v271 = vpack.c.bf16 %v244, %v241
  %v272 = vpack.c.bf16 %v252, %v249
  %v273 = vpack.c.bf16 %v260, %v257
  %v274 = vpack.c.bf16 %v268, %v265
  %v275 = vld [vmem:[%s4] sm:$0xf]
  %vm276 = vcmask 64512
  %v278 = vsel %vm276, %v271, 0
  %v281 = vsel %vm276, %v272, 0
  %v284 = vsel %vm276, %v273, 0
  %v287 = vsel %vm276, %v274, 0
  %vm289 = vcmask 1043456
  %v291 = vsel %vm289, %v275, 0
  %293 = vmatprep.subr.bf16.mxu0 0
  %294 = vmatpush1.bf16.msra.mxu0 %v291
  %295 = vmatprep.subr.bf16.mxu0 0
  %296 = vmatpush1.bf16.msra.mxu0 0
  %297 = vmatprep.subr.bf16.mxu0 0
  %298 = vmatpush1.bf16.msra.mxu0 0
  %299 = vmatprep.subr.bf16.mxu0 0
  %300 = vmatpush1.bf16.msra.mxu0 0
  %301 = vmatprep.subr.bf16.mxu0 0
  %302 = vmatpush1.bf16.msra.mxu0 0
  %303 = vmatprep.subr.bf16.mxu0 0
  %304 = vmatpush1.bf16.msra.mxu0 0
  %305 = vmatprep.subr.bf16.mxu0 0
  %306 = vmatpush1.bf16.msra.mxu0 0
  %307 = vmatprep.subr.bf16.mxu0 0
  %308 = vmatpush1.bf16.msra.mxu0 0
  %309 = vmatprep.subr.bf16.mxu0 0
  %310 = vmatpush1.bf16.msra.mxu0 0
  %311 = vmatprep.subr.bf16.mxu0 0
  %312 = vmatpush1.bf16.msra.mxu0 0
  %313 = vmatprep.subr.bf16.mxu0 0
  %314 = vmatpush1.bf16.msra.mxu0 0
  %315 = vmatprep.subr.bf16.mxu0 0
  %316 = vmatpush1.bf16.msra.mxu0 0
  %317 = vmatprep.subr.bf16.mxu0 0
  %318 = vmatpush1.bf16.msra.mxu0 0
  %319 = vmatprep.subr.bf16.mxu0 0
  %320 = vmatpush1.bf16.msra.mxu0 0
  %321 = vmatprep.subr.bf16.mxu0 0
  %322 = vmatpush1.bf16.msra.mxu0 0
  %323 = vmatprep.subr.bf16.mxu0 0
  %324 = vmatpush1.bf16.msra.mxu0 0
  %325 = vmatprep.mubr.bf16.mxu0 0
  %326 = vmatmul.mubr.bf16.gmra.mrb[0].mxu0 %v278
  %v327 = vpop.f32.mrb[0].mxu0
  %v328 = vadd.f32 0.0, %v327
  %v329 = vpop.f32.mrb[0].mxu0
  %v330 = vpop.f32.mrb[0].mxu0
  %v331 = vadd.f32 0.0, %v330
  %v332 = vpop.f32.mrb[0].mxu0
  %333 = vmatprep.mubr.bf16.mxu0 0
  %334 = vmatmul.mubr.bf16.gmra.mrb[0].mxu0 %v281
  %v335 = vpop.f32.mrb[0].mxu0
  %v336 = vadd.f32 0.0, %v335
  %v337 = vpop.f32.mrb[0].mxu0
  %v338 = vpop.f32.mrb[0].mxu0
  %v339 = vadd.f32 0.0, %v338
  %v340 = vpop.f32.mrb[0].mxu0
  %341 = vmatprep.mubr.bf16.mxu0 0
  %342 = vmatmul.mubr.bf16.gmra.mrb[0].mxu0 %v284
  %v343 = vpop.f32.mrb[0].mxu0
  %v344 = vadd.f32 0.0, %v343
  %v345 = vpop.f32.mrb[0].mxu0
  %v346 = vpop.f32.mrb[0].mxu0
  %v347 = vadd.f32 0.0, %v346
  %v348 = vpop.f32.mrb[0].mxu0
  %349 = vmatprep.mubr.bf16.mxu0 0
  %350 = vmatmul.mubr.bf16.gmra.mrb[0].mxu0 %v287
  %v351 = vpop.f32.mrb[0].mxu0
  %v352 = vadd.f32 0.0, %v351
  %v353 = vpop.f32.mrb[0].mxu0
  %v354 = vpop.f32.mrb[0].mxu0
  %v355 = vadd.f32 0.0, %v354
  %v356 = vpop.f32.mrb[0].mxu0
  %357 = vdwg.mxu0
  %v358 = vmax.f32 %v328, 1e-24
  %v359 = vmax.f32 %v331, 1e-24
  %v360 = vmax.f32 %v336, 1e-24
  %v361 = vmax.f32 %v339, 1e-24
  %v362 = vmax.f32 %v344, 1e-24
  %v363 = vmax.f32 %v347, 1e-24
  %v364 = vmax.f32 %v352, 1e-24
  %v365 = vmax.f32 %v355, 1e-24
  %v366 = vrsqrt.pop %v358
  %v367 = vrsqrt.pop %v359
  %v368 = vrsqrt.pop %v360
  %v369 = vrsqrt.pop %v361
  %v370 = vrsqrt.pop %v362
  %v371 = vrsqrt.pop %v363
  %v372 = vrsqrt.pop %v364
  %v373 = vrsqrt.pop %v365
  %v374 = vmul.f32 %v119, %v366
  %v375 = vmul.f32 %v122, %v367
  %v376 = vmul.f32 %v127, %v368
  %v377 = vmul.f32 %v130, %v369
  %v378 = vmul.f32 %v135, %v370
  %v379 = vmul.f32 %v138, %v371
  %v380 = vmul.f32 %v143, %v372
  %v381 = vmul.f32 %v146, %v373
  %v382 = vpack.c.bf16 %v375, %v374
  %v383 = vpack.c.bf16 %v377, %v376
  %v384 = vpack.c.bf16 %v379, %v378
  %v385 = vpack.c.bf16 %v381, %v380
  %v386 = vld [vmem:[%s5] sm:$0xf]
  %v387 = vld [vmem:[%s5 + $0x4] sm:$0xf]
  %v388 = vld [vmem:[%s5 + $0x8] sm:$0xf]
  %v389 = vld [vmem:[%s5 + $0xc] sm:$0xf]
  %v390 = vld [vmem:[%s5 + $0x10] sm:$0xf]
  %v391 = vld [vmem:[%s5 + $0x14] sm:$0xf]
  %v392 = vld [vmem:[%s5 + $0x18] sm:$0xf]
  %v393 = vld [vmem:[%s5 + $0x1c] sm:$0xf]
  %v394 = vld [vmem:[%s5 + $0x20] sm:$0xf]
  %v395 = vld [vmem:[%s5 + $0x24] sm:$0xf]
  %v396 = vld [vmem:[%s5 + $0x28] sm:$0xf]
  %v397 = vld [vmem:[%s5 + $0x2c] sm:$0xf]
  %v398 = vld [vmem:[%s5 + $0x30] sm:$0xf]
  %v399 = vld [vmem:[%s5 + $0x34] sm:$0xf]
  %v400 = vld [vmem:[%s5 + $0x38] sm:$0xf]
  %v401 = vld [vmem:[%s5 + $0x3c] sm:$0xf]
  %v402 = vld [vmem:[%s5 + $0x40] sm:$0xf]
  %v403 = vld [vmem:[%s5 + $0x44] sm:$0xf]
  %v404 = vld [vmem:[%s5 + $0x48] sm:$0xf]
  %v405 = vld [vmem:[%s5 + $0x4c] sm:$0xf]
  %v406 = vld [vmem:[%s5 + $0x50] sm:$0xf]
  %v407 = vld [vmem:[%s5 + $0x54] sm:$0xf]
  %v408 = vld [vmem:[%s5 + $0x58] sm:$0xf]
  %v409 = vld [vmem:[%s5 + $0x5c] sm:$0xf]
  %v410 = vld [vmem:[%s5 + $0x60] sm:$0xf]
  %v411 = vld [vmem:[%s5 + $0x64] sm:$0xf]
  %v412 = vld [vmem:[%s5 + $0x68] sm:$0xf]
  %v413 = vld [vmem:[%s5 + $0x6c] sm:$0xf]
  %v414 = vld [vmem:[%s5 + $0x70] sm:$0xf]
  %v415 = vld [vmem:[%s5 + $0x74] sm:$0xf]
  %v416 = vld [vmem:[%s5 + $0x78] sm:$0xf]
  %v417 = vld [vmem:[%s5 + $0x7c] sm:$0xf]
  %v426 = vunpack.c.l.b16 %v386
  %v427 = vunpack.c.l.b16 %v387
  %v428 = vunpack.c.l.b16 %v388
  %v429 = vunpack.c.l.b16 %v389
  %v430 = vunpack.c.l.b16 %v390
  %v431 = vunpack.c.l.b16 %v391
  %v432 = vunpack.c.l.b16 %v392
  %v433 = vunpack.c.l.b16 %v393
  %v434 = vpack.c.b16 %v427, %v426
  %v435 = vpack.c.b16 %v429, %v428
  %v436 = vpack.c.b16 %v431, %v430
  %v437 = vpack.c.b16 %v433, %v432
  %v443 = vsel %vm193, %v382, 0
  %445 = vmatprep.subr.bf16.mxu0 0
  %446 = vmatpush1.bf16.msra.mxu0 %v434
  %447 = vmatprep.subr.bf16.mxu0 0
  %448 = vmatpush1.bf16.msra.mxu0 %v435
  %449 = vmatprep.subr.bf16.mxu0 0
  %450 = vmatpush1.bf16.msra.mxu0 %v436
  %451 = vmatprep.subr.bf16.mxu0 0
  %452 = vmatpush1.bf16.msra.mxu0 %v437
  %453 = vmatprep.subr.bf16.mxu0 0
  %454 = vmatpush1.bf16.msra.mxu0 0
  %455 = vmatprep.subr.bf16.mxu0 0
  %456 = vmatpush1.bf16.msra.mxu0 0
  %457 = vmatprep.subr.bf16.mxu0 0
  %458 = vmatpush1.bf16.msra.mxu0 0
  %459 = vmatprep.subr.bf16.mxu0 0
  %460 = vmatpush1.bf16.msra.mxu0 0
  %461 = vmatprep.subr.bf16.mxu0 0
  %462 = vmatpush1.bf16.msra.mxu0 0
  %463 = vmatprep.subr.bf16.mxu0 0
  %464 = vmatpush1.bf16.msra.mxu0 0
  %465 = vmatprep.subr.bf16.mxu0 0
  %466 = vmatpush1.bf16.msra.mxu0 0
  %467 = vmatprep.subr.bf16.mxu0 0
  %468 = vmatpush1.bf16.msra.mxu0 0
  %469 = vmatprep.subr.bf16.mxu0 0
  %470 = vmatpush1.bf16.msra.mxu0 0
  %471 = vmatprep.subr.bf16.mxu0 0
  %472 = vmatpush1.bf16.msra.mxu0 0
  %473 = vmatprep.subr.bf16.mxu0 0
  %474 = vmatpush1.bf16.msra.mxu0 0
  %475 = vmatprep.subr.bf16.mxu0 0
  %476 = vmatpush1.bf16.msra.mxu0 0
  %477 = vmatprep.mubr.bf16.mxu0 0
  %478 = vmatmul.mubr.bf16.gmra.mrb[0].mxu0 %v443
  %v479 = vpop.f32.mrb[0].mxu0
  %v480 = vadd.f32 0.0, %v479
  %v481 = vpop.f32.mrb[0].mxu0
  %v482 = vpop.f32.mrb[0].mxu0
  %v483 = vadd.f32 0.0, %v482
  %v484 = vpop.f32.mrb[0].mxu0
  %485 = vdwg.mxu0
  %v494 = vunpack.c.l.b16 %v394
  %v495 = vunpack.c.l.b16 %v395
  %v496 = vunpack.c.l.b16 %v396
  %v497 = vunpack.c.l.b16 %v397
  %v498 = vunpack.c.l.b16 %v398
  %v499 = vunpack.c.l.b16 %v399
  %v500 = vunpack.c.l.b16 %v400
  %v501 = vunpack.c.l.b16 %v401
  %v502 = vpack.c.b16 %v495, %v494
  %v503 = vpack.c.b16 %v497, %v496
  %v504 = vpack.c.b16 %v499, %v498
  %v505 = vpack.c.b16 %v501, %v500
  %v511 = vsel %vm193, %v383, 0
  %513 = vmatprep.subr.bf16.mxu0 0
  %514 = vmatpush1.bf16.msra.mxu0 %v502
  %515 = vmatprep.subr.bf16.mxu0 0
  %516 = vmatpush1.bf16.msra.mxu0 %v503
  %517 = vmatprep.subr.bf16.mxu0 0
  %518 = vmatpush1.bf16.msra.mxu0 %v504
  %519 = vmatprep.subr.bf16.mxu0 0
  %520 = vmatpush1.bf16.msra.mxu0 %v505
  %521 = vmatprep.subr.bf16.mxu0 0
  %522 = vmatpush1.bf16.msra.mxu0 0
  %523 = vmatprep.subr.bf16.mxu0 0
  %524 = vmatpush1.bf16.msra.mxu0 0
  %525 = vmatprep.subr.bf16.mxu0 0
  %526 = vmatpush1.bf16.msra.mxu0 0
  %527 = vmatprep.subr.bf16.mxu0 0
  %528 = vmatpush1.bf16.msra.mxu0 0
  %529 = vmatprep.subr.bf16.mxu0 0
  %530 = vmatpush1.bf16.msra.mxu0 0
  %531 = vmatprep.subr.bf16.mxu0 0
  %532 = vmatpush1.bf16.msra.mxu0 0
  %533 = vmatprep.subr.bf16.mxu0 0
  %534 = vmatpush1.bf16.msra.mxu0 0
  %535 = vmatprep.subr.bf16.mxu0 0
  %536 = vmatpush1.bf16.msra.mxu0 0
  %537 = vmatprep.subr.bf16.mxu0 0
  %538 = vmatpush1.bf16.msra.mxu0 0
  %539 = vmatprep.subr.bf16.mxu0 0
  %540 = vmatpush1.bf16.msra.mxu0 0
  %541 = vmatprep.subr.bf16.mxu0 0
  %542 = vmatpush1.bf16.msra.mxu0 0
  %543 = vmatprep.subr.bf16.mxu0 0
  %544 = vmatpush1.bf16.msra.mxu0 0
  %545 = vmatprep.mubr.bf16.mxu0 0
  %546 = vmatmul.mubr.bf16.gmra.mrb[0].mxu0 %v511
  %v547 = vpop.f32.mrb[0].mxu0
  %v548 = vadd.f32 0.0, %v547
  %v549 = vpop.f32.mrb[0].mxu0
  %v550 = vpop.f32.mrb[0].mxu0
  %v551 = vadd.f32 0.0, %v550
  %v552 = vpop.f32.mrb[0].mxu0
  %553 = vdwg.mxu0
  %v562 = vunpack.c.l.b16 %v402
  %v563 = vunpack.c.l.b16 %v403
  %v564 = vunpack.c.l.b16 %v404
  %v565 = vunpack.c.l.b16 %v405
  %v566 = vunpack.c.l.b16 %v406
  %v567 = vunpack.c.l.b16 %v407
  %v568 = vunpack.c.l.b16 %v408
  %v569 = vunpack.c.l.b16 %v409
  %v570 = vpack.c.b16 %v563, %v562
  %v571 = vpack.c.b16 %v565, %v564
  %v572 = vpack.c.b16 %v567, %v566
  %v573 = vpack.c.b16 %v569, %v568
  %v579 = vsel %vm193, %v384, 0
  %581 = vmatprep.subr.bf16.mxu0 0
  %582 = vmatpush1.bf16.msra.mxu0 %v570
  %583 = vmatprep.subr.bf16.mxu0 0
  %584 = vmatpush1.bf16.msra.mxu0 %v571
  %585 = vmatprep.subr.bf16.mxu0 0
  %586 = vmatpush1.bf16.msra.mxu0 %v572
  %587 = vmatprep.subr.bf16.mxu0 0
  %588 = vmatpush1.bf16.msra.mxu0 %v573
  %589 = vmatprep.subr.bf16.mxu0 0
  %590 = vmatpush1.bf16.msra.mxu0 0
  %591 = vmatprep.subr.bf16.mxu0 0
  %592 = vmatpush1.bf16.msra.mxu0 0
  %593 = vmatprep.subr.bf16.mxu0 0
  %594 = vmatpush1.bf16.msra.mxu0 0
  %595 = vmatprep.subr.bf16.mxu0 0
  %596 = vmatpush1.bf16.msra.mxu0 0
  %597 = vmatprep.subr.bf16.mxu0 0
  %598 = vmatpush1.bf16.msra.mxu0 0
  %599 = vmatprep.subr.bf16.mxu0 0
  %600 = vmatpush1.bf16.msra.mxu0 0
  %601 = vmatprep.subr.bf16.mxu0 0
  %602 = vmatpush1.bf16.msra.mxu0 0
  %603 = vmatprep.subr.bf16.mxu0 0
  %604 = vmatpush1.bf16.msra.mxu0 0
  %605 = vmatprep.subr.bf16.mxu0 0
  %606 = vmatpush1.bf16.msra.mxu0 0
  %607 = vmatprep.subr.bf16.mxu0 0
  %608 = vmatpush1.bf16.msra.mxu0 0
  %609 = vmatprep.subr.bf16.mxu0 0
  %610 = vmatpush1.bf16.msra.mxu0 0
  %611 = vmatprep.subr.bf16.mxu0 0
  %612 = vmatpush1.bf16.msra.mxu0 0
  %613 = vmatprep.mubr.bf16.mxu0 0
  %614 = vmatmul.mubr.bf16.gmra.mrb[0].mxu0 %v579
  %v615 = vpop.f32.mrb[0].mxu0
  %v616 = vadd.f32 0.0, %v615
  %v617 = vpop.f32.mrb[0].mxu0
  %v618 = vpop.f32.mrb[0].mxu0
  %v619 = vadd.f32 0.0, %v618
  %v620 = vpop.f32.mrb[0].mxu0
  %621 = vdwg.mxu0
  %v630 = vunpack.c.l.b16 %v410
  %v631 = vunpack.c.l.b16 %v411
  %v632 = vunpack.c.l.b16 %v412
  %v633 = vunpack.c.l.b16 %v413
  %v634 = vunpack.c.l.b16 %v414
  %v635 = vunpack.c.l.b16 %v415
  %v636 = vunpack.c.l.b16 %v416
  %v637 = vunpack.c.l.b16 %v417
  %v638 = vpack.c.b16 %v631, %v630
  %v639 = vpack.c.b16 %v633, %v632
  %v640 = vpack.c.b16 %v635, %v634
  %v641 = vpack.c.b16 %v637, %v636
  %v647 = vsel %vm193, %v385, 0
  %649 = vmatprep.subr.bf16.mxu0 0
  %650 = vmatpush1.bf16.msra.mxu0 %v638
  %651 = vmatprep.subr.bf16.mxu0 0
  %652 = vmatpush1.bf16.msra.mxu0 %v639
  %653 = vmatprep.subr.bf16.mxu0 0
  %654 = vmatpush1.bf16.msra.mxu0 %v640
  %655 = vmatprep.subr.bf16.mxu0 0
  %656 = vmatpush1.bf16.msra.mxu0 %v641
  %657 = vmatprep.subr.bf16.mxu0 0
  %658 = vmatpush1.bf16.msra.mxu0 0
  %659 = vmatprep.subr.bf16.mxu0 0
  %660 = vmatpush1.bf16.msra.mxu0 0
  %661 = vmatprep.subr.bf16.mxu0 0
  %662 = vmatpush1.bf16.msra.mxu0 0
  %663 = vmatprep.subr.bf16.mxu0 0
  %664 = vmatpush1.bf16.msra.mxu0 0
  %665 = vmatprep.subr.bf16.mxu0 0
  %666 = vmatpush1.bf16.msra.mxu0 0
  %667 = vmatprep.subr.bf16.mxu0 0
  %668 = vmatpush1.bf16.msra.mxu0 0
  %669 = vmatprep.subr.bf16.mxu0 0
  %670 = vmatpush1.bf16.msra.mxu0 0
  %671 = vmatprep.subr.bf16.mxu0 0
  %672 = vmatpush1.bf16.msra.mxu0 0
  %673 = vmatprep.subr.bf16.mxu0 0
  %674 = vmatpush1.bf16.msra.mxu0 0
  %675 = vmatprep.subr.bf16.mxu0 0
  %676 = vmatpush1.bf16.msra.mxu0 0
  %677 = vmatprep.subr.bf16.mxu0 0
  %678 = vmatpush1.bf16.msra.mxu0 0
  %679 = vmatprep.subr.bf16.mxu0 0
  %680 = vmatpush1.bf16.msra.mxu0 0
  %681 = vmatprep.mubr.bf16.mxu0 0
  %682 = vmatmul.mubr.bf16.gmra.mrb[0].mxu0 %v647
  %v683 = vpop.f32.mrb[0].mxu0
  %v684 = vadd.f32 0.0, %v683
  %v685 = vpop.f32.mrb[0].mxu0
  %v686 = vpop.f32.mrb[0].mxu0
  %v687 = vadd.f32 0.0, %v686
  %v688 = vpop.f32.mrb[0].mxu0
  %689 = vdwg.mxu0
  %v690 = vpack.c.bf16 %v483, %v480
  %v691 = vpack.c.bf16 %v551, %v548
  %v692 = vpack.c.bf16 %v619, %v616
  %v693 = vpack.c.bf16 %v687, %v684
  %v694 = vld [vmem:[%s6] sm:$0xf]
  %v695 = vld [vmem:[%s6 + $0x4] sm:$0xf]
  %v696 = vld [vmem:[%s6 + $0x8] sm:$0xf]
  %v697 = vld [vmem:[%s6 + $0xc] sm:$0xf]
  %v698 = vld [vmem:[%s6 + $0x10] sm:$0xf]
  %v699 = vld [vmem:[%s7] sm:$0x1]
  %v701 = vlaneseq
  %v702 = vshrl.u32 %v701, 7
  %v703 = vsub.s32 0, %v702
  %v704 = vrot.slane %v699, %v703
  %v711 = vunpack.c.l.b16 %v694
  %v712 = vunpack.c.l.b16 %v695
  %v713 = vunpack.c.l.b16 %v696
  %v714 = vunpack.c.l.b16 %v697
  %v715 = vunpack.c.l.b16 %v698
  %v716 = vpack.c.b16 %v712, %v711
  %v717 = vpack.c.b16 %v714, %v713
  %v718 = vpack.c.b16 %v715, %v715
  %vm721 = vcmask 326656
  %v723 = vsel %vm721, %v690, 0
  %v726 = vsel %vm721, %v691, 0
  %v729 = vsel %vm721, %v692, 0
  %v732 = vsel %vm721, %v693, 0
  %v735 = vsel %vm289, %v718, 0
  %737 = vmatprep.subr.bf16.mxu0 0
  %738 = vmatpush1.bf16.msra.mxu0 %v716
  %739 = vmatprep.subr.bf16.mxu0 0
  %740 = vmatpush1.bf16.msra.mxu0 %v717
  %741 = vmatprep.subr.bf16.mxu0 0
  %742 = vmatpush1.bf16.msra.mxu0 %v735
  %743 = vmatprep.subr.bf16.mxu0 0
  %744 = vmatpush1.bf16.msra.mxu0 0
  %745 = vmatprep.subr.bf16.mxu0 0
  %746 = vmatpush1.bf16.msra.mxu0 0
  %747 = vmatprep.subr.bf16.mxu0 0
  %748 = vmatpush1.bf16.msra.mxu0 0
  %749 = vmatprep.subr.bf16.mxu0 0
  %750 = vmatpush1.bf16.msra.mxu0 0
  %751 = vmatprep.subr.bf16.mxu0 0
  %752 = vmatpush1.bf16.msra.mxu0 0
  %753 = vmatprep.subr.bf16.mxu0 0
  %754 = vmatpush1.bf16.msra.mxu0 0
  %755 = vmatprep.subr.bf16.mxu0 0
  %756 = vmatpush1.bf16.msra.mxu0 0
  %757 = vmatprep.subr.bf16.mxu0 0
  %758 = vmatpush1.bf16.msra.mxu0 0
  %759 = vmatprep.subr.bf16.mxu0 0
  %760 = vmatpush1.bf16.msra.mxu0 0
  %761 = vmatprep.subr.bf16.mxu0 0
  %762 = vmatpush1.bf16.msra.mxu0 0
  %763 = vmatprep.subr.bf16.mxu0 0
  %764 = vmatpush1.bf16.msra.mxu0 0
  %765 = vmatprep.subr.bf16.mxu0 0
  %766 = vmatpush1.bf16.msra.mxu0 0
  %767 = vmatprep.subr.bf16.mxu0 0
  %768 = vmatpush1.bf16.msra.mxu0 0
  %769 = vmatprep.mubr.bf16.mxu0 0
  %770 = vmatmul.mubr.bf16.gmra.mrb[0].mxu0 %v723
  %v771 = vpop.f32.mrb[0].mxu0
  %v772 = vadd.f32 %v704, %v771
  %v773 = vpop.f32.mrb[0].mxu0
  %v774 = vpop.f32.mrb[0].mxu0
  %v775 = vadd.f32 %v704, %v774
  %v776 = vpop.f32.mrb[0].mxu0
  %777 = vmatprep.mubr.bf16.mxu0 0
  %778 = vmatmul.mubr.bf16.gmra.mrb[0].mxu0 %v726
  %v779 = vpop.f32.mrb[0].mxu0
  %v780 = vadd.f32 %v704, %v779
  %v781 = vpop.f32.mrb[0].mxu0
  %v782 = vpop.f32.mrb[0].mxu0
  %v783 = vadd.f32 %v704, %v782
  %v784 = vpop.f32.mrb[0].mxu0
  %785 = vmatprep.mubr.bf16.mxu0 0
  %786 = vmatmul.mubr.bf16.gmra.mrb[0].mxu0 %v729
  %v787 = vpop.f32.mrb[0].mxu0
  %v788 = vadd.f32 %v704, %v787
  %v789 = vpop.f32.mrb[0].mxu0
  %v790 = vpop.f32.mrb[0].mxu0
  %v791 = vadd.f32 %v704, %v790
  %v792 = vpop.f32.mrb[0].mxu0
  %793 = vmatprep.mubr.bf16.mxu0 0
  %794 = vmatmul.mubr.bf16.gmra.mrb[0].mxu0 %v732
  %v795 = vpop.f32.mrb[0].mxu0
  %v796 = vadd.f32 %v704, %v795
  %v797 = vpop.f32.mrb[0].mxu0
  %v798 = vpop.f32.mrb[0].mxu0
  %v799 = vadd.f32 %v704, %v798
  %v800 = vpop.f32.mrb[0].mxu0
  %801 = vdwg.mxu0
  %v802 = vpack.c.bf16 %v775, %v772
  %v803 = vpack.c.bf16 %v783, %v780
  %v804 = vpack.c.bf16 %v791, %v788
  %v805 = vpack.c.bf16 %v799, %v796
  %v806 = vld [vmem:[%s8] sm:$0xf]
  %v807 = vld [vmem:[%s8 + $0x4] sm:$0xf]
  %v808 = vld [vmem:[%s8 + $0x8] sm:$0xf]
  %v809 = vld [vmem:[%s8 + $0xc] sm:$0xf]
  %v810 = vld [vmem:[%s9] sm:$0x1]
  %v812 = vlaneseq
  %v813 = vshrl.u32 %v812, 7
  %v814 = vsub.s32 0, %v813
  %v815 = vrot.slane %v810, %v814
  %v821 = vunpack.c.l.b16 %v806
  %v822 = vunpack.c.l.b16 %v807
  %v823 = vunpack.c.l.b16 %v808
  %v824 = vunpack.c.l.b16 %v809
  %v825 = vpack.c.b16 %v822, %v821
  %v826 = vpack.c.b16 %v824, %v823
  %v830 = vsel %vm71, %v802, 0
  %v833 = vsel %vm71, %v803, 0
  %v836 = vsel %vm71, %v804, 0
  %v839 = vsel %vm71, %v805, 0
  %841 = vmatprep.subr.bf16.mxu0 0
  %842 = vmatpush1.bf16.msra.mxu0 %v825
  %843 = vmatprep.subr.bf16.mxu0 0
  %844 = vmatpush1.bf16.msra.mxu0 %v826
  %845 = vmatprep.subr.bf16.mxu0 0
  %846 = vmatpush1.bf16.msra.mxu0 0
  %847 = vmatprep.subr.bf16.mxu0 0
  %848 = vmatpush1.bf16.msra.mxu0 0
  %849 = vmatprep.subr.bf16.mxu0 0
  %850 = vmatpush1.bf16.msra.mxu0 0
  %851 = vmatprep.subr.bf16.mxu0 0
  %852 = vmatpush1.bf16.msra.mxu0 0
  %853 = vmatprep.subr.bf16.mxu0 0
  %854 = vmatpush1.bf16.msra.mxu0 0
  %855 = vmatprep.subr.bf16.mxu0 0
  %856 = vmatpush1.bf16.msra.mxu0 0
  %857 = vmatprep.subr.bf16.mxu0 0
  %858 = vmatpush1.bf16.msra.mxu0 0
  %859 = vmatprep.subr.bf16.mxu0 0
  %860 = vmatpush1.bf16.msra.mxu0 0
  %861 = vmatprep.subr.bf16.mxu0 0
  %862 = vmatpush1.bf16.msra.mxu0 0
  %863 = vmatprep.subr.bf16.mxu0 0
  %864 = vmatpush1.bf16.msra.mxu0 0
  %865 = vmatprep.subr.bf16.mxu0 0
  %866 = vmatpush1.bf16.msra.mxu0 0
  %867 = vmatprep.subr.bf16.mxu0 0
  %868 = vmatpush1.bf16.msra.mxu0 0
  %869 = vmatprep.subr.bf16.mxu0 0
  %870 = vmatpush1.bf16.msra.mxu0 0
  %871 = vmatprep.subr.bf16.mxu0 0
  %872 = vmatpush1.bf16.msra.mxu0 0
  %873 = vmatprep.mubr.bf16.mxu0 0
  %874 = vmatmul.mubr.bf16.gmra.mrb[0].mxu0 %v830
  %v875 = vpop.f32.mrb[0].mxu0
  %v876 = vadd.f32 %v815, %v875
  %v877 = vpop.f32.mrb[0].mxu0
  %v878 = vpop.f32.mrb[0].mxu0
  %v879 = vadd.f32 %v815, %v878
  %v880 = vpop.f32.mrb[0].mxu0
  %881 = vmatprep.mubr.bf16.mxu0 0
  %882 = vmatmul.mubr.bf16.gmra.mrb[0].mxu0 %v833
  %v883 = vpop.f32.mrb[0].mxu0
  %v884 = vadd.f32 %v815, %v883
  %v885 = vpop.f32.mrb[0].mxu0
  %v886 = vpop.f32.mrb[0].mxu0
  %v887 = vadd.f32 %v815, %v886
  %v888 = vpop.f32.mrb[0].mxu0
  %889 = vmatprep.mubr.bf16.mxu0 0
  %890 = vmatmul.mubr.bf16.gmra.mrb[0].mxu0 %v836
  %v891 = vpop.f32.mrb[0].mxu0
  %v892 = vadd.f32 %v815, %v891
  %v893 = vpop.f32.mrb[0].mxu0
  %v894 = vpop.f32.mrb[0].mxu0
  %v895 = vadd.f32 %v815, %v894
  %v896 = vpop.f32.mrb[0].mxu0
  %897 = vmatprep.mubr.bf16.mxu0 0
  %898 = vmatmul.mubr.bf16.gmra.mrb[0].mxu0 %v839
  %v899 = vpop.f32.mrb[0].mxu0
  %v900 = vadd.f32 %v815, %v899
  %v901 = vpop.f32.mrb[0].mxu0
  %v902 = vpop.f32.mrb[0].mxu0
  %v903 = vadd.f32 %v815, %v902
  %v904 = vpop.f32.mrb[0].mxu0
  %905 = vdwg.mxu0
  %914 = vrot.lane.b32.xlu0 %v480, 32
  %v915 = vpop.permute.xlu0 %914
  %916 = vrot.lane.b32.xlu0 %v483, 32
  %v917 = vpop.permute.xlu0 %916
  %918 = vrot.lane.b32.xlu0 %v548, 32
  %v919 = vpop.permute.xlu0 %918
  %920 = vrot.lane.b32.xlu0 %v551, 32
  %v921 = vpop.permute.xlu0 %920
  %922 = vrot.lane.b32.xlu0 %v616, 32
  %v923 = vpop.permute.xlu0 %922
  %924 = vrot.lane.b32.xlu0 %v619, 32
  %v925 = vpop.permute.xlu0 %924
  %926 = vrot.lane.b32.xlu0 %v684, 32
  %v927 = vpop.permute.xlu0 %926
  %928 = vrot.lane.b32.xlu0 %v687, 32
  %v929 = vpop.permute.xlu0 %928
  %946 = vrot.lane.b32.xlu0 %v374, 72
  %v947 = vpop.permute.xlu0 %946
  %948 = vrot.lane.b32.xlu0 %v375, 72
  %v949 = vpop.permute.xlu0 %948
  %950 = vrot.lane.b32.xlu0 %v376, 72
  %v951 = vpop.permute.xlu0 %950
  %952 = vrot.lane.b32.xlu0 %v377, 72
  %v953 = vpop.permute.xlu0 %952
  %954 = vrot.lane.b32.xlu0 %v378, 72
  %v955 = vpop.permute.xlu0 %954
  %956 = vrot.lane.b32.xlu0 %v379, 72
  %v957 = vpop.permute.xlu0 %956
  %958 = vrot.lane.b32.xlu0 %v380, 72
  %v959 = vpop.permute.xlu0 %958
  %960 = vrot.lane.b32.xlu0 %v381, 72
  %v961 = vpop.permute.xlu0 %960
  %v970 = vsel %vm71, %v876, %v915
  %v971 = vsel %vm71, %v879, %v917
  %v972 = vsel %vm71, %v884, %v919
  %v973 = vsel %vm71, %v887, %v921
  %v974 = vsel %vm71, %v892, %v923
  %v975 = vsel %vm71, %v895, %v925
  %v976 = vsel %vm71, %v900, %v927
  %v977 = vsel %vm71, %v903, %v929
  %vm978 = vcmask 588800
  %v979 = vsel %vm978, %v970, %v947
  %v980 = vsel %vm978, %v971, %v949
  %v981 = vsel %vm978, %v972, %v951
  %v982 = vsel %vm978, %v973, %v953
  %v983 = vsel %vm978, %v974, %v955
  %v984 = vsel %vm978, %v975, %v957
  %v985 = vsel %vm978, %v976, %v959
  %v986 = vsel %vm978, %v977, %v961
  %v987 = vsel %vm276, %v947, 0.0
  %v988 = vsel %vm276, %v949, 0.0
  %v989 = vsel %vm276, %v951, 0.0
  %v990 = vsel %vm276, %v953, 0.0
  %v991 = vsel %vm276, %v955, 0.0
  %v992 = vsel %vm276, %v957, 0.0
  %v993 = vsel %vm276, %v959, 0.0
  %v994 = vsel %vm276, %v961, 0.0
  %995 = vst [vmem:[%s10] sm:$0xff] %v979
  %996 = vst [vmem:[%s10 + $0x8] sm:$0xff] %v987
  %997 = vst [vmem:[%s10 + $0x10] sm:$0xff] %v980
  %998 = vst [vmem:[%s10 + $0x18] sm:$0xff] %v988
  %999 = vst [vmem:[%s10 + $0x20] sm:$0xff] %v981
  %1000 = vst [vmem:[%s10 + $0x28] sm:$0xff] %v989
  %1001 = vst [vmem:[%s10 + $0x30] sm:$0xff] %v982
  %1002 = vst [vmem:[%s10 + $0x38] sm:$0xff] %v990
  %1003 = vst [vmem:[%s10 + $0x40] sm:$0xff] %v983
  %1004 = vst [vmem:[%s10 + $0x48] sm:$0xff] %v991
  %1005 = vst [vmem:[%s10 + $0x50] sm:$0xff] %v984
  %1006 = vst [vmem:[%s10 + $0x58] sm:$0xff] %v992
  %1007 = vst [vmem:[%s10 + $0x60] sm:$0xff] %v985
  %1008 = vst [vmem:[%s10 + $0x68] sm:$0xff] %v993
  %1009 = vst [vmem:[%s10 + $0x70] sm:$0xff] %v986
  %1010 = vst [vmem:[%s10 + $0x78] sm:$0xff] %v994
  // Predicated region
  $region42: #{attention_layer_primal_cos.1} parent=0 // pred_check
    _
  $region43: #{attention_layer_primal_cos.1} parent=0 // pred_check_branch
    %1012 = sbr.rel (0) target = $region45
  $region44: #{attention_layer_primal_cos.1} parent=0 // pred_region
    _
  $region45: #{attention_layer_primal_cos.1} parent=0 // pred_fallthru
    _
  // Predicated region
  $region46: #{attention_layer_primal_cos.1} parent=0 // pred_check
    _
  $region47: #{attention_layer_primal_cos.1} parent=0 // pred_check_branch
    %1014 = sbr.rel (0) target = $region49
  $region48: #{attention_layer_primal_cos.1} parent=0 // pred_region
    _
  $region49: #{attention_layer_primal_cos.1} parent=0 // pred_fallthru
    _

</llo_original>
